<compile_context>
chip_gen: v6e
topology: v6e:2x2x1
jax: 0.10.0
libtpu: 0.0.40
codegen_flags: <defaults>
</compile_context>

<pallas_src>
import math
import functools

import jax
import jax.numpy as jnp
from jax.experimental import pallas as pl
from jax.experimental.pallas import tpu as pltpu  # noqa: F401  (TPU backend assumed)

# ---------------- config (small, consistent with the module) ----------------
VOCAB = 64          # config.data.vocabSize
NEMD = 32           # config.model.transformer.nemd
NHEAD = 4           # config.model.transformer.nhead
NHID = 64           # config.model.transformer.nhid
NLAYER = 2          # config.model.transformer.nlayer
SEQ = 8
BATCH = 2
HEAD_DIM = NEMD // NHEAD
LN_EPS = 1e-5
NEG_INF = -1e30     # stand-in for float('-inf') in the additive attention bias
LANES = 128         # slab lane width / padded logits width


# ---------------- static slab layout (shared by packer and kernel) ----------------
def _slab_layout(S, B):
    """Row layout of the single packed (rows, 128) f32 weight/constant slab.
    Offsets are static Python ints (never traced); every tensor's row start is
    8-aligned so in-kernel ref windows are sublane-aligned."""
    N = S * B
    C = NHEAD * N
    entries = [
        ("emb", VOCAB, NEMD),          # embedding * sqrt(nemd)
        ("out_wT", NEMD, LANES),       # tied output projection, padded to 128 lanes
        ("out_b", 1, LANES),
        ("pe", N, NEMD),               # positional encoding, batch-major rows
        ("bias", N, C),                # causal + same-batch additive attention bias
        ("bmask", C, NEMD),            # head block mask for the expanded K/V layout
        ("gsum", C, C),                # per-head group-sum matrix (softmax denominator)
    ]
    for l in range(NLAYER):
        entries += [
            (f"in_wT{l}", NEMD, 3 * NEMD), (f"in_b{l}", 1, 3 * NEMD),
            (f"op_wT{l}", NEMD, NEMD), (f"op_b{l}", 1, NEMD),
            (f"l1_wT{l}", NEMD, NHID), (f"l1_b{l}", 1, NHID),
            (f"l2_wT{l}", NHID, NEMD), (f"l2_b{l}", 1, NEMD),
            (f"ln1_w{l}", 1, NEMD), (f"ln1_b{l}", 1, NEMD),
            (f"ln2_w{l}", 1, NEMD), (f"ln2_b{l}", 1, NEMD),
        ]
    off, r = {}, 0
    for name, rows, cols in entries:
        assert cols <= LANES, (name, cols)
        off[name] = (r, rows, cols)
        r += -(-rows // 8) * 8          # 8-align each tensor's row block
    return off, r


# ---------------- fused Pallas kernel (one launch per forward) ----------------
def _layer_norm(y, g, b):
    mu = jnp.mean(y, axis=-1, keepdims=True)
    var = jnp.mean((y - mu) ** 2, axis=-1, keepdims=True)
    return (y - mu) * jax.lax.rsqrt(var + LN_EPS) * g + b


def _fused_lm_kernel(onehot_ref, slab_ref, logits_ref, *, off, n_layer, n_head):
    E = NEMD

    def W(name):                          # static ref window -> load (zero-cost view)
        r0, rows, cols = off[name]
        return slab_ref[pl.ds(r0, rows), pl.ds(0, cols)]

    # --- embedding (one-hot matmul on the MXU; sqrt(nemd) pre-folded) + pos enc ---
    x = jnp.dot(onehot_ref[...], W("emb"), preferred_element_type=jnp.float32)  # (N, E)
    x = x + W("pe")                       # emb dropout: eval-mode identity

    # constants shared by every layer (loaded once, outside the layer loop)
    bias = W("bias")                      # (N, C): 0 where attendable, -1e30 elsewhere
    bmask = W("bmask")                    # (C, E): 1 where channel e belongs to column's head
    gsum = W("gsum")                      # (C, C): 1 where two columns share a head

    for l in range(n_layer):
        # --- multi-head self-attention: all heads & batches in 3 plain 2-D matmuls ---
        qkv = jnp.dot(x, W(f"in_wT{l}"),
                      preferred_element_type=jnp.float32) + W(f"in_b{l}")     # (N, 3E)
        q = qkv[:, :E]                    # 1/sqrt(head_dim) pre-folded into q weights
        k = qkv[:, E:2 * E]
        v = qkv[:, 2 * E:]

        # head-blocked expansion: column c = h*N + n' carries only head h's channels
        k_exp = jnp.concatenate([k] * n_head, axis=0) * bmask                 # (C, E)
        v_exp = jnp.concatenate([v] * n_head, axis=0) * bmask                 # (C, E)

        s = jnp.einsum("ne,ce->nc", q, k_exp,
                       preferred_element_type=jnp.float32) + bias             # (N, C)
        # global row max (exact softmax here; per-head max only matters for score
        # spreads > ~87, impossible at these magnitudes)
        s = s - jnp.max(s, axis=-1, keepdims=True)
        p = jnp.exp(s)                                     # masked entries -> exactly 0
        denom = jnp.dot(p, gsum, preferred_element_type=jnp.float32)   # per-head sums
        p = p / jnp.maximum(denom, 1e-30)                  # exact division (review note)
        ctx = jnp.dot(p, v_exp, preferred_element_type=jnp.float32)    # (N, E), heads merged
        attn = jnp.dot(ctx, W(f"op_wT{l}"),
                       preferred_element_type=jnp.float32) + W(f"op_b{l}")
        x = _layer_norm(x + attn, W(f"ln1_w{l}"), W(f"ln1_b{l}"))      # post-norm

        # --- feed-forward ---
        ff = jnp.dot(x, W(f"l1_wT{l}"),
                     preferred_element_type=jnp.float32) + W(f"l1_b{l}")
        ff = jnp.maximum(ff, 0.0)
        ff = jnp.dot(ff, W(f"l2_wT{l}"),
                     preferred_element_type=jnp.float32) + W(f"l2_b{l}")
        x = _layer_norm(x + ff, W(f"ln2_w{l}"), W(f"ln2_b{l}"))

    # --- tied output projection, lane-dense (padded to 128 output lanes) ---
    logits_ref[...] = jnp.dot(x, W("out_wT"),
                              preferred_element_type=jnp.float32) + W("out_b")


# ---------------- constants ----------------
def make_pe(S, E):
    # PositionalEncoding buffer (only the S rows we need; no 5000-row scatter chain)
    pos = jnp.arange(S, dtype=jnp.float32)[:, None]
    div = jnp.exp(-math.log(10000.0) * jnp.arange(0, E, 2, dtype=jnp.float32) / E)
    ang = pos * div                                                   # (S, E//2)
    return jnp.stack([jnp.sin(ang), jnp.cos(ang)], axis=-1).reshape(S, E)


def causal_mask(S):
    # _generate_square_subsequent_mask: 0 on/below diag, -inf strictly above
    upper = jnp.triu(jnp.ones((S, S), jnp.float32), k=1)
    return jnp.where(upper == 1.0, NEG_INF, 0.0).astype(jnp.float32)


# ---------------- parameters ----------------
def init_params(key):
    keys = jax.random.split(key, 1 + NLAYER)

    def unif(k, shape, a):
        return jax.random.uniform(k, shape, jnp.float32, -a, a)

    params = {"emb_w": unif(keys[0], (VOCAB, NEMD), 0.1)}   # init_weights(): U(-0.1, 0.1)
    layers = []
    for l in range(NLAYER):
        k = jax.random.split(keys[1 + l], 6)
        layers.append(dict(
            in_proj_w=unif(k[0], (3 * NEMD, NEMD), 1.0 / math.sqrt(NEMD)),
            in_proj_b=jnp.zeros((3 * NEMD,), jnp.float32),
            out_proj_w=unif(k[1], (NEMD, NEMD), 1.0 / math.sqrt(NEMD)),
            out_proj_b=jnp.zeros((NEMD,), jnp.float32),
            lin1_w=unif(k[2], (NHID, NEMD), 1.0 / math.sqrt(NEMD)),
            lin1_b=unif(k[3], (NHID,), 1.0 / math.sqrt(NEMD)),
            lin2_w=unif(k[4], (NEMD, NHID), 1.0 / math.sqrt(NHID)),
            lin2_b=unif(k[5], (NEMD,), 1.0 / math.sqrt(NHID)),
            ln1_w=jnp.ones((NEMD,), jnp.float32),
            ln1_b=jnp.zeros((NEMD,), jnp.float32),
            ln2_w=jnp.ones((NEMD,), jnp.float32),
            ln2_b=jnp.zeros((NEMD,), jnp.float32),
        ))
    params["layers"] = layers
    params["out_w"] = params["emb_w"]                 # tie_weight=True
    params["out_b"] = jnp.zeros((VOCAB,), jnp.float32)
    return params


def pack_params(params, S, B):
    """One-time host-side packing into a single lane-aligned (rows, 128) f32 slab:
    pre-transposed weights, q-scale and sqrt(nemd) folded in, positional-encoding
    rows, the (causal + same-batch) additive attention bias, the head block mask
    for the expanded K/V layout and the head group-sum matrix."""
    E, Dh, V = NEMD, HEAD_DIM, VOCAB
    N, C = S * B, NHEAD * S * B
    off, total_rows = _slab_layout(S, B)

    pieces = {}
    pieces["emb"] = params["emb_w"] * math.sqrt(E)                     # (V, E)
    pieces["out_wT"] = jnp.pad(params["out_w"].T, ((0, 0), (0, LANES - V)))
    pieces["out_b"] = jnp.pad(params["out_b"].reshape(1, V), ((0, 0), (0, LANES - V)))
    pieces["pe"] = jnp.tile(make_pe(S, E), (B, 1))                     # (N, E) batch-major

    # column index c = h*N + b'*S + j  (head-major copies of all N key rows)
    n_idx = jnp.arange(N)
    b_of_n, s_of_n = n_idx // S, n_idx % S
    c_idx = jnp.arange(C)
    npr = c_idx % N
    b_of_c, j_of_c, h_of_c = npr // S, npr % S, c_idx // N
    allowed = (b_of_c[None, :] == b_of_n[:, None]) & (j_of_c[None, :] <= s_of_n[:, None])
    pieces["bias"] = jnp.where(allowed, 0.0, NEG_INF).astype(jnp.float32)        # (N, C)
    h_of_e = jnp.arange(E) // Dh
    pieces["bmask"] = (h_of_c[:, None] == h_of_e[None, :]).astype(jnp.float32)   # (C, E)
    pieces["gsum"] = (h_of_c[:, None] == h_of_c[None, :]).astype(jnp.float32)    # (C, C)

    q_scale = jnp.concatenate([jnp.full((E,), 1.0 / math.sqrt(Dh), jnp.float32),
                               jnp.ones((2 * E,), jnp.float32)])
    for l, lyr in enumerate(params["layers"]):
        in_w = lyr["in_proj_w"] * q_scale[:, None]     # fold attention scale into q rows
        in_b = lyr["in_proj_b"] * q_scale
        pieces[f"in_wT{l}"] = in_w.T                    # (E, 3E)
        pieces[f"in_b{l}"] = in_b.reshape(1, 3 * E)
        pieces[f"op_wT{l}"] = lyr["out_proj_w"].T
        pieces[f"op_b{l}"] = lyr["out_proj_b"].reshape(1, E)
        pieces[f"l1_wT{l}"] = lyr["lin1_w"].T
        pieces[f"l1_b{l}"] = lyr["lin1_b"].reshape(1, NHID)
        pieces[f"l2_wT{l}"] = lyr["lin2_w"].T
        pieces[f"l2_b{l}"] = lyr["lin2_b"].reshape(1, E)
        pieces[f"ln1_w{l}"] = lyr["ln1_w"].reshape(1, E)
        pieces[f"ln1_b{l}"] = lyr["ln1_b"].reshape(1, E)
        pieces[f"ln2_w{l}"] = lyr["ln2_w"].reshape(1, E)
        pieces[f"ln2_b{l}"] = lyr["ln2_b"].reshape(1, E)

    slab = jnp.zeros((total_rows, LANES), jnp.float32)
    for name, (r0, rows, cols) in off.items():
        arr = jnp.asarray(pieces[name], jnp.float32)
        assert arr.shape == (rows, cols), (name, arr.shape, (rows, cols))
        slab = slab.at[r0:r0 + rows, 0:cols].set(arr)
    return {"slab": slab}


# ---------------- forward: one fused pallas_call ----------------
def forward(packed, src):
    S, B = src.shape
    N = S * B
    off, _ = _slab_layout(S, B)          # static Python layout (matches pack_params)

    # batch-major row order (row = b*S + s); embedding lookup is done in-kernel as a
    # one-hot matmul on the MXU; the lane-aligned (N, V) f32 one-hot is built here.
    tok = src.T.reshape(N).astype(jnp.int32)
    onehot = jax.nn.one_hot(tok, VOCAB, dtype=jnp.float32)           # (N, V)

    kernel = functools.partial(_fused_lm_kernel, off=off,
                               n_layer=NLAYER, n_head=NHEAD)
    logits_pad = pl.pallas_call(
        kernel,
        out_shape=jax.ShapeDtypeStruct((N, LANES), jnp.float32),
        # no grid: 2 inputs + 1 output -> 3 DMAs; everything resident in VMEM (~365 KB)
        # TODO(synk): at larger batch/seq add a ("parallel",) grid over token blocks for
        #   v7x megacore, switch the weight slab to bf16 on v6e/v7x, and replace the
        #   one-hot embedding with a scalar-prefetch gather once VOCAB/NEMD grow beyond
        #   the VMEM-resident regime.
    )(onehot, packed["slab"])

    logits = logits_pad[:, :VOCAB]                                   # drop lane padding
    return logits.reshape(B, S, VOCAB).transpose(1, 0, 2)            # (S, B, V)


# ---------------- pure-JAX reference (for a sanity check) ----------------
def reference_forward(params, src):
    S, B = src.shape
    E, H, Dh = NEMD, NHEAD, HEAD_DIM
    mask = causal_mask(S)
    pe = make_pe(S, E)
    x = jnp.take(params["emb_w"], src, axis=0) * math.sqrt(E) + pe[:, None, :]
    x = x.reshape(S * B, E)

    def lin(t, w, b):
        return t @ w.T + b

    def ln(t, g, b):
        mu = t.mean(-1, keepdims=True)
        var = ((t - mu) ** 2).mean(-1, keepdims=True)
        return (t - mu) / jnp.sqrt(var + LN_EPS) * g + b

    def to_heads(t):
        return t.reshape(S, B, H, Dh).transpose(1, 2, 0, 3).reshape(B * H, S, Dh)

    for lyr in params["layers"]:
        qkv = lin(x, lyr["in_proj_w"], lyr["in_proj_b"])
        q, k, v = jnp.split(qkv, 3, axis=-1)
        q, k, v = to_heads(q) / math.sqrt(Dh), to_heads(k), to_heads(v)
        s = jnp.einsum("bqd,bkd->bqk", q, k) + mask
        p = jax.nn.softmax(s, axis=-1)
        a = jnp.einsum("bqk,bkd->bqd", p, v)
        a = a.reshape(B, H, S, Dh).transpose(2, 0, 1, 3).reshape(S * B, E)
        a = lin(a, lyr["out_proj_w"], lyr["out_proj_b"])
        x = ln(x + a, lyr["ln1_w"], lyr["ln1_b"])
        f = jax.nn.relu(lin(x, lyr["lin1_w"], lyr["lin1_b"]))
        f = lin(f, lyr["lin2_w"], lyr["lin2_b"])
        x = ln(x + f, lyr["ln2_w"], lyr["ln2_b"])
    return lin(x, params["out_w"], params["out_b"]).reshape(S, B, VOCAB)


if __name__ == "__main__":
    key = jax.random.PRNGKey(0)
    pkey, skey = jax.random.split(key)
    params = init_params(pkey)
    src = jax.random.randint(skey, (SEQ, BATCH), 0, VOCAB, dtype=jnp.int32)

    # one-time packing (pre-transpose / stack / fold scales / build attention constants)
    packed = pack_params(params, SEQ, BATCH)

    fwd = jax.jit(forward)
    out = jax.block_until_ready(fwd(packed, src))

    assert out.shape == (SEQ, BATCH, VOCAB)
    assert bool(jnp.all(jnp.isfinite(out)))

    ref = reference_forward(params, src)
    assert bool(jnp.allclose(out, ref, atol=1e-2, rtol=1e-2)), "mismatch vs reference"

    print("KERNEL_OK")
</pallas_src>

<mosaic_0001>
module attributes {stable_mosaic.version = 11 : i64} {
  func.func @_fused_lm_kernel(%arg0: memref<16x64xf32, #tpu.memory_space<vmem>>, %arg1: memref<712x128xf32, #tpu.memory_space<vmem>>, %arg2: memref<16x128xf32, #tpu.memory_space<vmem>>) attributes {dimension_semantics = [], scalar_prefetch = 0 : i64, scratch_operands = 0 : i64, tpu.core_type = #tpu.core_type<tc>} {
    %c0 = arith.constant 0 : index
    %c0_0 = arith.constant 0 : index
    %0 = vector.load %arg0[%c0, %c0_0] : memref<16x64xf32, #tpu.memory_space<vmem>>, vector<16x64xf32>
    %c0_1 = arith.constant 0 : index
    %c0_2 = arith.constant 0 : index
    %1 = vector.load %arg1[%c0_1, %c0_2] : memref<712x128xf32, #tpu.memory_space<vmem>>, vector<64x32xf32>
    %cst = arith.constant dense<0.000000e+00> : vector<16x32xf32>
    %2 = tpu.matmul %0, %1, %cst {dimension_numbers = #tpu.dot_dimension_numbers<[1], [0], [0], [1], [0, 0, 1, 1], [], []>} : vector<16x64xf32>, vector<64x32xf32>, vector<16x32xf32> -> vector<16x32xf32>
    %c104 = arith.constant 104 : index
    %c0_3 = arith.constant 0 : index
    %3 = vector.load %arg1[%c104, %c0_3] : memref<712x128xf32, #tpu.memory_space<vmem>>, vector<16x32xf32>
    %4 = arith.addf %2, %3 : vector<16x32xf32>
    %c120 = arith.constant 120 : index
    %c0_4 = arith.constant 0 : index
    %5 = vector.load %arg1[%c120, %c0_4] : memref<712x128xf32, #tpu.memory_space<vmem>>, vector<16x64xf32>
    %c136 = arith.constant 136 : index
    %c0_5 = arith.constant 0 : index
    %6 = vector.load %arg1[%c136, %c0_5] : memref<712x128xf32, #tpu.memory_space<vmem>>, vector<64x32xf32>
    %c200 = arith.constant 200 : index
    %c0_6 = arith.constant 0 : index
    %7 = vector.load %arg1[%c200, %c0_6] : memref<712x128xf32, #tpu.memory_space<vmem>>, vector<64x64xf32>
    %c264 = arith.constant 264 : index
    %c0_7 = arith.constant 0 : index
    %8 = vector.load %arg1[%c264, %c0_7] : memref<712x128xf32, #tpu.memory_space<vmem>>, vector<32x96xf32>
    %cst_8 = arith.constant dense<0.000000e+00> : vector<16x96xf32>
    %9 = tpu.matmul %4, %8, %cst_8 {dimension_numbers = #tpu.dot_dimension_numbers<[1], [0], [0], [1], [0, 0, 1, 1], [], []>} : vector<16x32xf32>, vector<32x96xf32>, vector<16x96xf32> -> vector<16x96xf32>
    %c296 = arith.constant 296 : index
    %c0_9 = arith.constant 0 : index
    %10 = vector.load %arg1[%c296, %c0_9] : memref<712x128xf32, #tpu.memory_space<vmem>>, vector<1x96xf32>
    %11 = vector.broadcast %10 : vector<1x96xf32> to vector<16x96xf32>
    %12 = arith.addf %9, %11 : vector<16x96xf32>
    %13 = vector.extract_strided_slice %12 {offsets = [0, 0], sizes = [16, 32], strides = [1, 1]} : vector<16x96xf32> to vector<16x32xf32>
    %14 = vector.extract_strided_slice %12 {offsets = [0, 32], sizes = [16, 32], strides = [1, 1]} : vector<16x96xf32> to vector<16x32xf32>
    %15 = vector.extract_strided_slice %12 {offsets = [0, 64], sizes = [16, 32], strides = [1, 1]} : vector<16x96xf32> to vector<16x32xf32>
    %16 = tpu.concatenate %14, %14, %14, %14 in 0 : vector<16x32xf32>, vector<16x32xf32>, vector<16x32xf32>, vector<16x32xf32> -> vector<64x32xf32>
    %17 = arith.mulf %16, %6 : vector<64x32xf32>
    %18 = tpu.concatenate %15, %15, %15, %15 in 0 : vector<16x32xf32>, vector<16x32xf32>, vector<16x32xf32>, vector<16x32xf32> -> vector<64x32xf32>
    %19 = arith.mulf %18, %6 : vector<64x32xf32>
    "tpu.trace_start"() <{level = 10 : i32, message = "ne,ce->nc"}> : () -> ()
    %cst_10 = arith.constant dense<0.000000e+00> : vector<16x64xf32>
    %20 = tpu.matmul %13, %17, %cst_10 {dimension_numbers = #tpu.dot_dimension_numbers<[1], [1], [0], [0], [0, 0, 1, 0], [], []>} : vector<16x32xf32>, vector<64x32xf32>, vector<16x64xf32> -> vector<16x64xf32>
    "tpu.trace_stop"() : () -> ()
    %21 = arith.addf %20, %5 : vector<16x64xf32>
    %cst_11 = arith.constant dense<0xFF800000> : vector<16xf32>
    %22 = vector.multi_reduction <maximumf>, %21, %cst_11 [1] : vector<16x64xf32> to vector<16xf32>
    %23 = vector.shape_cast %22 : vector<16xf32> to vector<16x1xf32>
    %24 = vector.broadcast %23 : vector<16x1xf32> to vector<16x64xf32>
    %25 = arith.subf %21, %24 : vector<16x64xf32>
    %26 = math.exp %25 : vector<16x64xf32>
    %cst_12 = arith.constant dense<0.000000e+00> : vector<16x64xf32>
    %27 = tpu.matmul %26, %7, %cst_12 {dimension_numbers = #tpu.dot_dimension_numbers<[1], [0], [0], [1], [0, 0, 1, 1], [], []>} : vector<16x64xf32>, vector<64x64xf32>, vector<16x64xf32> -> vector<16x64xf32>
    %cst_13 = arith.constant 1.000000e-30 : f32
    %28 = vector.broadcast %cst_13 : f32 to vector<16x64xf32>
    %29 = arith.maximumf %27, %28 : vector<16x64xf32>
    %30 = arith.divf %26, %29 : vector<16x64xf32>
    %cst_14 = arith.constant dense<0.000000e+00> : vector<16x32xf32>
    %31 = tpu.matmul %30, %19, %cst_14 {dimension_numbers = #tpu.dot_dimension_numbers<[1], [0], [0], [1], [0, 0, 1, 1], [], []>} : vector<16x64xf32>, vector<64x32xf32>, vector<16x32xf32> -> vector<16x32xf32>
    %c304 = arith.constant 304 : index
    %c0_15 = arith.constant 0 : index
    %32 = vector.load %arg1[%c304, %c0_15] : memref<712x128xf32, #tpu.memory_space<vmem>>, vector<32x32xf32>
    %cst_16 = arith.constant dense<0.000000e+00> : vector<16x32xf32>
    %33 = tpu.matmul %31, %32, %cst_16 {dimension_numbers = #tpu.dot_dimension_numbers<[1], [0], [0], [1], [0, 0, 1, 1], [], []>} : vector<16x32xf32>, vector<32x32xf32>, vector<16x32xf32> -> vector<16x32xf32>
    %c336 = arith.constant 336 : index
    %c0_17 = arith.constant 0 : index
    %34 = vector.load %arg1[%c336, %c0_17] : memref<712x128xf32, #tpu.memory_space<vmem>>, vector<1x32xf32>
    %35 = vector.broadcast %34 : vector<1x32xf32> to vector<16x32xf32>
    %36 = arith.addf %33, %35 : vector<16x32xf32>
    %37 = arith.addf %4, %36 : vector<16x32xf32>
    %c456 = arith.constant 456 : index
    %c0_18 = arith.constant 0 : index
    %38 = vector.load %arg1[%c456, %c0_18] : memref<712x128xf32, #tpu.memory_space<vmem>>, vector<1x32xf32>
    %c464 = arith.constant 464 : index
    %c0_19 = arith.constant 0 : index
    %39 = vector.load %arg1[%c464, %c0_19] : memref<712x128xf32, #tpu.memory_space<vmem>>, vector<1x32xf32>
    %cst_20 = arith.constant dense<0.000000e+00> : vector<16xf32>
    %40 = vector.multi_reduction <add>, %37, %cst_20 [1] : vector<16x32xf32> to vector<16xf32>
    %41 = vector.shape_cast %40 : vector<16xf32> to vector<16x1xf32>
    %cst_21 = arith.constant 3.200000e+01 : f32
    %42 = vector.broadcast %cst_21 : f32 to vector<16x1xf32>
    %43 = arith.divf %41, %42 : vector<16x1xf32>
    %44 = vector.broadcast %43 : vector<16x1xf32> to vector<16x32xf32>
    %45 = arith.subf %37, %44 : vector<16x32xf32>
    %46 = arith.mulf %45, %45 : vector<16x32xf32>
    %cst_22 = arith.constant dense<0.000000e+00> : vector<16xf32>
    %47 = vector.multi_reduction <add>, %46, %cst_22 [1] : vector<16x32xf32> to vector<16xf32>
    %48 = vector.shape_cast %47 : vector<16xf32> to vector<16x1xf32>
    %cst_23 = arith.constant 3.200000e+01 : f32
    %49 = vector.broadcast %cst_23 : f32 to vector<16x1xf32>
    %50 = arith.divf %48, %49 : vector<16x1xf32>
    %51 = vector.broadcast %43 : vector<16x1xf32> to vector<16x32xf32>
    %52 = arith.subf %37, %51 : vector<16x32xf32>
    %cst_24 = arith.constant 9.99999974E-6 : f32
    %53 = vector.broadcast %cst_24 : f32 to vector<16x1xf32>
    %54 = arith.addf %50, %53 : vector<16x1xf32>
    %55 = math.rsqrt %54 : vector<16x1xf32>
    %56 = vector.broadcast %55 : vector<16x1xf32> to vector<16x32xf32>
    %57 = arith.mulf %52, %56 : vector<16x32xf32>
    %58 = vector.broadcast %38 : vector<1x32xf32> to vector<16x32xf32>
    %59 = arith.mulf %57, %58 : vector<16x32xf32>
    %60 = vector.broadcast %39 : vector<1x32xf32> to vector<16x32xf32>
    %61 = arith.addf %59, %60 : vector<16x32xf32>
    %c344 = arith.constant 344 : index
    %c0_25 = arith.constant 0 : index
    %62 = vector.load %arg1[%c344, %c0_25] : memref<712x128xf32, #tpu.memory_space<vmem>>, vector<32x64xf32>
    %cst_26 = arith.constant dense<0.000000e+00> : vector<16x64xf32>
    %63 = tpu.matmul %61, %62, %cst_26 {dimension_numbers = #tpu.dot_dimension_numbers<[1], [0], [0], [1], [0, 0, 1, 1], [], []>} : vector<16x32xf32>, vector<32x64xf32>, vector<16x64xf32> -> vector<16x64xf32>
    %c376 = arith.constant 376 : index
    %c0_27 = arith.constant 0 : index
    %64 = vector.load %arg1[%c376, %c0_27] : memref<712x128xf32, #tpu.memory_space<vmem>>, vector<1x64xf32>
    %65 = vector.broadcast %64 : vector<1x64xf32> to vector<16x64xf32>
    %66 = arith.addf %63, %65 : vector<16x64xf32>
    %cst_28 = arith.constant 0.000000e+00 : f32
    %67 = vector.broadcast %cst_28 : f32 to vector<16x64xf32>
    %68 = arith.maximumf %66, %67 : vector<16x64xf32>
    %c384 = arith.constant 384 : index
    %c0_29 = arith.constant 0 : index
    %69 = vector.load %arg1[%c384, %c0_29] : memref<712x128xf32, #tpu.memory_space<vmem>>, vector<64x32xf32>
    %cst_30 = arith.constant dense<0.000000e+00> : vector<16x32xf32>
    %70 = tpu.matmul %68, %69, %cst_30 {dimension_numbers = #tpu.dot_dimension_numbers<[1], [0], [0], [1], [0, 0, 1, 1], [], []>} : vector<16x64xf32>, vector<64x32xf32>, vector<16x32xf32> -> vector<16x32xf32>
    %c448 = arith.constant 448 : index
    %c0_31 = arith.constant 0 : index
    %71 = vector.load %arg1[%c448, %c0_31] : memref<712x128xf32, #tpu.memory_space<vmem>>, vector<1x32xf32>
    %72 = vector.broadcast %71 : vector<1x32xf32> to vector<16x32xf32>
    %73 = arith.addf %70, %72 : vector<16x32xf32>
    %74 = arith.addf %61, %73 : vector<16x32xf32>
    %c472 = arith.constant 472 : index
    %c0_32 = arith.constant 0 : index
    %75 = vector.load %arg1[%c472, %c0_32] : memref<712x128xf32, #tpu.memory_space<vmem>>, vector<1x32xf32>
    %c480 = arith.constant 480 : index
    %c0_33 = arith.constant 0 : index
    %76 = vector.load %arg1[%c480, %c0_33] : memref<712x128xf32, #tpu.memory_space<vmem>>, vector<1x32xf32>
    %cst_34 = arith.constant dense<0.000000e+00> : vector<16xf32>
    %77 = vector.multi_reduction <add>, %74, %cst_34 [1] : vector<16x32xf32> to vector<16xf32>
    %78 = vector.shape_cast %77 : vector<16xf32> to vector<16x1xf32>
    %cst_35 = arith.constant 3.200000e+01 : f32
    %79 = vector.broadcast %cst_35 : f32 to vector<16x1xf32>
    %80 = arith.divf %78, %79 : vector<16x1xf32>
    %81 = vector.broadcast %80 : vector<16x1xf32> to vector<16x32xf32>
    %82 = arith.subf %74, %81 : vector<16x32xf32>
    %83 = arith.mulf %82, %82 : vector<16x32xf32>
    %cst_36 = arith.constant dense<0.000000e+00> : vector<16xf32>
    %84 = vector.multi_reduction <add>, %83, %cst_36 [1] : vector<16x32xf32> to vector<16xf32>
    %85 = vector.shape_cast %84 : vector<16xf32> to vector<16x1xf32>
    %cst_37 = arith.constant 3.200000e+01 : f32
    %86 = vector.broadcast %cst_37 : f32 to vector<16x1xf32>
    %87 = arith.divf %85, %86 : vector<16x1xf32>
    %88 = vector.broadcast %80 : vector<16x1xf32> to vector<16x32xf32>
    %89 = arith.subf %74, %88 : vector<16x32xf32>
    %cst_38 = arith.constant 9.99999974E-6 : f32
    %90 = vector.broadcast %cst_38 : f32 to vector<16x1xf32>
    %91 = arith.addf %87, %90 : vector<16x1xf32>
    %92 = math.rsqrt %91 : vector<16x1xf32>
    %93 = vector.broadcast %92 : vector<16x1xf32> to vector<16x32xf32>
    %94 = arith.mulf %89, %93 : vector<16x32xf32>
    %95 = vector.broadcast %75 : vector<1x32xf32> to vector<16x32xf32>
    %96 = arith.mulf %94, %95 : vector<16x32xf32>
    %97 = vector.broadcast %76 : vector<1x32xf32> to vector<16x32xf32>
    %98 = arith.addf %96, %97 : vector<16x32xf32>
    %c488 = arith.constant 488 : index
    %c0_39 = arith.constant 0 : index
    %99 = vector.load %arg1[%c488, %c0_39] : memref<712x128xf32, #tpu.memory_space<vmem>>, vector<32x96xf32>
    %cst_40 = arith.constant dense<0.000000e+00> : vector<16x96xf32>
    %100 = tpu.matmul %98, %99, %cst_40 {dimension_numbers = #tpu.dot_dimension_numbers<[1], [0], [0], [1], [0, 0, 1, 1], [], []>} : vector<16x32xf32>, vector<32x96xf32>, vector<16x96xf32> -> vector<16x96xf32>
    %c520 = arith.constant 520 : index
    %c0_41 = arith.constant 0 : index
    %101 = vector.load %arg1[%c520, %c0_41] : memref<712x128xf32, #tpu.memory_space<vmem>>, vector<1x96xf32>
    %102 = vector.broadcast %101 : vector<1x96xf32> to vector<16x96xf32>
    %103 = arith.addf %100, %102 : vector<16x96xf32>
    %104 = vector.extract_strided_slice %103 {offsets = [0, 0], sizes = [16, 32], strides = [1, 1]} : vector<16x96xf32> to vector<16x32xf32>
    %105 = vector.extract_strided_slice %103 {offsets = [0, 32], sizes = [16, 32], strides = [1, 1]} : vector<16x96xf32> to vector<16x32xf32>
    %106 = vector.extract_strided_slice %103 {offsets = [0, 64], sizes = [16, 32], strides = [1, 1]} : vector<16x96xf32> to vector<16x32xf32>
    %107 = tpu.concatenate %105, %105, %105, %105 in 0 : vector<16x32xf32>, vector<16x32xf32>, vector<16x32xf32>, vector<16x32xf32> -> vector<64x32xf32>
    %108 = arith.mulf %107, %6 : vector<64x32xf32>
    %109 = tpu.concatenate %106, %106, %106, %106 in 0 : vector<16x32xf32>, vector<16x32xf32>, vector<16x32xf32>, vector<16x32xf32> -> vector<64x32xf32>
    %110 = arith.mulf %109, %6 : vector<64x32xf32>
    "tpu.trace_start"() <{level = 10 : i32, message = "ne,ce->nc"}> : () -> ()
    %cst_42 = arith.constant dense<0.000000e+00> : vector<16x64xf32>
    %111 = tpu.matmul %104, %108, %cst_42 {dimension_numbers = #tpu.dot_dimension_numbers<[1], [1], [0], [0], [0, 0, 1, 0], [], []>} : vector<16x32xf32>, vector<64x32xf32>, vector<16x64xf32> -> vector<16x64xf32>
    "tpu.trace_stop"() : () -> ()
    %112 = arith.addf %111, %5 : vector<16x64xf32>
    %cst_43 = arith.constant dense<0xFF800000> : vector<16xf32>
    %113 = vector.multi_reduction <maximumf>, %112, %cst_43 [1] : vector<16x64xf32> to vector<16xf32>
    %114 = vector.shape_cast %113 : vector<16xf32> to vector<16x1xf32>
    %115 = vector.broadcast %114 : vector<16x1xf32> to vector<16x64xf32>
    %116 = arith.subf %112, %115 : vector<16x64xf32>
    %117 = math.exp %116 : vector<16x64xf32>
    %cst_44 = arith.constant dense<0.000000e+00> : vector<16x64xf32>
    %118 = tpu.matmul %117, %7, %cst_44 {dimension_numbers = #tpu.dot_dimension_numbers<[1], [0], [0], [1], [0, 0, 1, 1], [], []>} : vector<16x64xf32>, vector<64x64xf32>, vector<16x64xf32> -> vector<16x64xf32>
    %cst_45 = arith.constant 1.000000e-30 : f32
    %119 = vector.broadcast %cst_45 : f32 to vector<16x64xf32>
    %120 = arith.maximumf %118, %119 : vector<16x64xf32>
    %121 = arith.divf %117, %120 : vector<16x64xf32>
    %cst_46 = arith.constant dense<0.000000e+00> : vector<16x32xf32>
    %122 = tpu.matmul %121, %110, %cst_46 {dimension_numbers = #tpu.dot_dimension_numbers<[1], [0], [0], [1], [0, 0, 1, 1], [], []>} : vector<16x64xf32>, vector<64x32xf32>, vector<16x32xf32> -> vector<16x32xf32>
    %c528 = arith.constant 528 : index
    %c0_47 = arith.constant 0 : index
    %123 = vector.load %arg1[%c528, %c0_47] : memref<712x128xf32, #tpu.memory_space<vmem>>, vector<32x32xf32>
    %cst_48 = arith.constant dense<0.000000e+00> : vector<16x32xf32>
    %124 = tpu.matmul %122, %123, %cst_48 {dimension_numbers = #tpu.dot_dimension_numbers<[1], [0], [0], [1], [0, 0, 1, 1], [], []>} : vector<16x32xf32>, vector<32x32xf32>, vector<16x32xf32> -> vector<16x32xf32>
    %c560 = arith.constant 560 : index
    %c0_49 = arith.constant 0 : index
    %125 = vector.load %arg1[%c560, %c0_49] : memref<712x128xf32, #tpu.memory_space<vmem>>, vector<1x32xf32>
    %126 = vector.broadcast %125 : vector<1x32xf32> to vector<16x32xf32>
    %127 = arith.addf %124, %126 : vector<16x32xf32>
    %128 = arith.addf %98, %127 : vector<16x32xf32>
    %c680 = arith.constant 680 : index
    %c0_50 = arith.constant 0 : index
    %129 = vector.load %arg1[%c680, %c0_50] : memref<712x128xf32, #tpu.memory_space<vmem>>, vector<1x32xf32>
    %c688 = arith.constant 688 : index
    %c0_51 = arith.constant 0 : index
    %130 = vector.load %arg1[%c688, %c0_51] : memref<712x128xf32, #tpu.memory_space<vmem>>, vector<1x32xf32>
    %cst_52 = arith.constant dense<0.000000e+00> : vector<16xf32>
    %131 = vector.multi_reduction <add>, %128, %cst_52 [1] : vector<16x32xf32> to vector<16xf32>
    %132 = vector.shape_cast %131 : vector<16xf32> to vector<16x1xf32>
    %cst_53 = arith.constant 3.200000e+01 : f32
    %133 = vector.broadcast %cst_53 : f32 to vector<16x1xf32>
    %134 = arith.divf %132, %133 : vector<16x1xf32>
    %135 = vector.broadcast %134 : vector<16x1xf32> to vector<16x32xf32>
    %136 = arith.subf %128, %135 : vector<16x32xf32>
    %137 = arith.mulf %136, %136 : vector<16x32xf32>
    %cst_54 = arith.constant dense<0.000000e+00> : vector<16xf32>
    %138 = vector.multi_reduction <add>, %137, %cst_54 [1] : vector<16x32xf32> to vector<16xf32>
    %139 = vector.shape_cast %138 : vector<16xf32> to vector<16x1xf32>
    %cst_55 = arith.constant 3.200000e+01 : f32
    %140 = vector.broadcast %cst_55 : f32 to vector<16x1xf32>
    %141 = arith.divf %139, %140 : vector<16x1xf32>
    %142 = vector.broadcast %134 : vector<16x1xf32> to vector<16x32xf32>
    %143 = arith.subf %128, %142 : vector<16x32xf32>
    %cst_56 = arith.constant 9.99999974E-6 : f32
    %144 = vector.broadcast %cst_56 : f32 to vector<16x1xf32>
    %145 = arith.addf %141, %144 : vector<16x1xf32>
    %146 = math.rsqrt %145 : vector<16x1xf32>
    %147 = vector.broadcast %146 : vector<16x1xf32> to vector<16x32xf32>
    %148 = arith.mulf %143, %147 : vector<16x32xf32>
    %149 = vector.broadcast %129 : vector<1x32xf32> to vector<16x32xf32>
    %150 = arith.mulf %148, %149 : vector<16x32xf32>
    %151 = vector.broadcast %130 : vector<1x32xf32> to vector<16x32xf32>
    %152 = arith.addf %150, %151 : vector<16x32xf32>
    %c568 = arith.constant 568 : index
    %c0_57 = arith.constant 0 : index
    %153 = vector.load %arg1[%c568, %c0_57] : memref<712x128xf32, #tpu.memory_space<vmem>>, vector<32x64xf32>
    %cst_58 = arith.constant dense<0.000000e+00> : vector<16x64xf32>
    %154 = tpu.matmul %152, %153, %cst_58 {dimension_numbers = #tpu.dot_dimension_numbers<[1], [0], [0], [1], [0, 0, 1, 1], [], []>} : vector<16x32xf32>, vector<32x64xf32>, vector<16x64xf32> -> vector<16x64xf32>
    %c600 = arith.constant 600 : index
    %c0_59 = arith.constant 0 : index
    %155 = vector.load %arg1[%c600, %c0_59] : memref<712x128xf32, #tpu.memory_space<vmem>>, vector<1x64xf32>
    %156 = vector.broadcast %155 : vector<1x64xf32> to vector<16x64xf32>
    %157 = arith.addf %154, %156 : vector<16x64xf32>
    %cst_60 = arith.constant 0.000000e+00 : f32
    %158 = vector.broadcast %cst_60 : f32 to vector<16x64xf32>
    %159 = arith.maximumf %157, %158 : vector<16x64xf32>
    %c608 = arith.constant 608 : index
    %c0_61 = arith.constant 0 : index
    %160 = vector.load %arg1[%c608, %c0_61] : memref<712x128xf32, #tpu.memory_space<vmem>>, vector<64x32xf32>
    %cst_62 = arith.constant dense<0.000000e+00> : vector<16x32xf32>
    %161 = tpu.matmul %159, %160, %cst_62 {dimension_numbers = #tpu.dot_dimension_numbers<[1], [0], [0], [1], [0, 0, 1, 1], [], []>} : vector<16x64xf32>, vector<64x32xf32>, vector<16x32xf32> -> vector<16x32xf32>
    %c672 = arith.constant 672 : index
    %c0_63 = arith.constant 0 : index
    %162 = vector.load %arg1[%c672, %c0_63] : memref<712x128xf32, #tpu.memory_space<vmem>>, vector<1x32xf32>
    %163 = vector.broadcast %162 : vector<1x32xf32> to vector<16x32xf32>
    %164 = arith.addf %161, %163 : vector<16x32xf32>
    %165 = arith.addf %152, %164 : vector<16x32xf32>
    %c696 = arith.constant 696 : index
    %c0_64 = arith.constant 0 : index
    %166 = vector.load %arg1[%c696, %c0_64] : memref<712x128xf32, #tpu.memory_space<vmem>>, vector<1x32xf32>
    %c704 = arith.constant 704 : index
    %c0_65 = arith.constant 0 : index
    %167 = vector.load %arg1[%c704, %c0_65] : memref<712x128xf32, #tpu.memory_space<vmem>>, vector<1x32xf32>
    %cst_66 = arith.constant dense<0.000000e+00> : vector<16xf32>
    %168 = vector.multi_reduction <add>, %165, %cst_66 [1] : vector<16x32xf32> to vector<16xf32>
    %169 = vector.shape_cast %168 : vector<16xf32> to vector<16x1xf32>
    %cst_67 = arith.constant 3.200000e+01 : f32
    %170 = vector.broadcast %cst_67 : f32 to vector<16x1xf32>
    %171 = arith.divf %169, %170 : vector<16x1xf32>
    %172 = vector.broadcast %171 : vector<16x1xf32> to vector<16x32xf32>
    %173 = arith.subf %165, %172 : vector<16x32xf32>
    %174 = arith.mulf %173, %173 : vector<16x32xf32>
    %cst_68 = arith.constant dense<0.000000e+00> : vector<16xf32>
    %175 = vector.multi_reduction <add>, %174, %cst_68 [1] : vector<16x32xf32> to vector<16xf32>
    %176 = vector.shape_cast %175 : vector<16xf32> to vector<16x1xf32>
    %cst_69 = arith.constant 3.200000e+01 : f32
    %177 = vector.broadcast %cst_69 : f32 to vector<16x1xf32>
    %178 = arith.divf %176, %177 : vector<16x1xf32>
    %179 = vector.broadcast %171 : vector<16x1xf32> to vector<16x32xf32>
    %180 = arith.subf %165, %179 : vector<16x32xf32>
    %cst_70 = arith.constant 9.99999974E-6 : f32
    %181 = vector.broadcast %cst_70 : f32 to vector<16x1xf32>
    %182 = arith.addf %178, %181 : vector<16x1xf32>
    %183 = math.rsqrt %182 : vector<16x1xf32>
    %184 = vector.broadcast %183 : vector<16x1xf32> to vector<16x32xf32>
    %185 = arith.mulf %180, %184 : vector<16x32xf32>
    %186 = vector.broadcast %166 : vector<1x32xf32> to vector<16x32xf32>
    %187 = arith.mulf %185, %186 : vector<16x32xf32>
    %188 = vector.broadcast %167 : vector<1x32xf32> to vector<16x32xf32>
    %189 = arith.addf %187, %188 : vector<16x32xf32>
    %c64 = arith.constant 64 : index
    %c0_71 = arith.constant 0 : index
    %190 = vector.load %arg1[%c64, %c0_71] : memref<712x128xf32, #tpu.memory_space<vmem>>, vector<32x128xf32>
    %cst_72 = arith.constant dense<0.000000e+00> : vector<16x128xf32>
    %191 = tpu.matmul %189, %190, %cst_72 {dimension_numbers = #tpu.dot_dimension_numbers<[1], [0], [0], [1], [0, 0, 1, 1], [], []>} : vector<16x32xf32>, vector<32x128xf32>, vector<16x128xf32> -> vector<16x128xf32>
    %c96 = arith.constant 96 : index
    %c0_73 = arith.constant 0 : index
    %192 = vector.load %arg1[%c96, %c0_73] : memref<712x128xf32, #tpu.memory_space<vmem>>, vector<1x128xf32>
    %193 = vector.broadcast %192 : vector<1x128xf32> to vector<16x128xf32>
    %194 = arith.addf %191, %193 : vector<16x128xf32>
    %c0_74 = arith.constant 0 : index
    %c0_75 = arith.constant 0 : index
    %195 = vector.load %arg2[%c0_74, %c0_75] : memref<16x128xf32, #tpu.memory_space<vmem>>, vector<16x128xf32>
    tpu.vector_store %arg2[%c0_74, %c0_75], %194 {strides = array<i32>} : memref<16x128xf32, #tpu.memory_space<vmem>>, vector<16x128xf32>,
    return
  }
}

</mosaic_0001>

<llo_original>
// kernel: eq.1
$region0: #{eq.1}
  %s0 = inlined_call_operand.vmem [shape: s32[2,8], index: 0, kind: input, shape index: {}]
  %s1 = inlined_call_operand.vmem [shape: s32[16], index: 1, kind: output, shape index: {}]
  $region1: #{eq.1} parent=0
    #allocation0 [shape = 'u8[4096]{0}', space=vmem, size = 0x1000, scoped, tag = 'scoped mem for output reshape']
    #allocation1 [shape = 'u8[4096]{0}', space=vmem, size = 0x1000, scoped, tag = 'scoped mem for input reshape']
    %s3 = sshll.u32 1, 2
    %s4 = ssub.s32 %s3, 1
    %v5 = vld [vmem:[%s0] sm:%s4]
    %6 = vst [vmem:[#allocation1] sm:%s4] %v5
    %v7 = vld [vmem:[#allocation1] sm:$0x1]
    %vm8 = vcmask 64512
    %9 = vst.msk [vmem:[#allocation0] sm:$0x1] %vm8, %v7
    %s10 = scalar_lea.vmem [#allocation1], 1
    %v11 = vld [vmem:[%s10] sm:$0x1]
    %12 = vrot.lane.b32.xlu0 %v11, 8
    %v13 = vpop.permute.xlu0 %12
    %vm14 = vcmask 130112
    %15 = vst.msk [vmem:[#allocation0] sm:$0x1] %vm14, %v13
    %s17 = sshll.u32 1, 1
    %s18 = ssub.s32 %s17, 1
    %v20 = vld [vmem:[#allocation0] sm:%s18]
    %s21 = sshll.u32 1, 1
    %s22 = ssub.s32 %s21, 1
    %23 = vst [vmem:[%s1] sm:%s22] %v20

// kernel: forward.1
$region0: #{forward.1}
  #allocation0 [shape = 'u32[]', space=smem, size = 0x4, offset = 0x4, fixed_abs, tag = 'smem constant byte address 0x4 - core index']
  #allocation1 [shape = 'u32[144,128]{1,0:T(1,128)}', space=vmem, size = 0x12000, scoped, tag = 'internal scratch']
  %s0 = inlined_call_operand.vmem [shape: f32[16,64], index: 0, kind: input, shape index: {}]
  %s1 = inlined_call_operand.hbm [shape: f32[712,128], index: 1, kind: input, shape index: {}]
  %s2 = inlined_call_operand.vmem [shape: f32[16,128], index: 2, kind: output, shape index: {}]
  %s3 = sld [smem:[#allocation0]]
  $region22: #{forward.1} parent=0
    _
  %s5 = ssub.s32 1, %s3
  %s6 = scalar_select 0, %s5, %s3
  $region1: #{forward.1} parent=0
    #allocation2 [shape = 'u8[364544]{0}', space=vmem, size = 0x59000, scoped, tag = 'input window, operand 1, single buffered']
    #allocation3 [shape = 's32[1]{0}', space=sflag, size = 0x4, scoped, tag = 'scoped memory for forward.1']
    %7 = vsyncpa [#allocation3], 0
    // Predicated region
    $region2: #{forward.1} parent=1 // pred_check
      _
    $region3: #{forward.1} parent=1 // pred_check_branch
      %9 = sbr.rel (0) target = $region5
    $region4: #{forward.1} parent=1 // pred_region
      _
    $region5: #{forward.1} parent=1 // pred_fallthru
      _
    // Predicated region
    $region6: #{forward.1} parent=1 // pred_check
      _
    $region7: #{forward.1} parent=1 // pred_check_branch
      %11 = sbr.rel (0) target = $region9
    $region8: #{forward.1} parent=1 // pred_region
      %s13 = ssub.s32 11392, 11392
      %14 = vsyncadd [#allocation3], %s13
      %s15 = sshll.u32 [#allocation2], 4
      %s16 = int_to_ptr.vmem [resolvable:$true] %s15
      %21 = dma.hbm_to_vmem [thread:$0]  %s1, 11392, %s16, [#allocation3], 128, 128, 8
    $region9: #{forward.1} parent=1 // pred_fallthru
      _
    // Predicated region
    $region10: #{forward.1} parent=1 // pred_check
      _
    $region11: #{forward.1} parent=1 // pred_check_branch
      %23 = sbr.rel (0) target = $region13
    $region12: #{forward.1} parent=1 // pred_region
      %24 = dma.done [#allocation3], 11392
    $region13: #{forward.1} parent=1 // pred_fallthru
      _
    %v25 = vld [vmem:[%s0] sm:$0xff]
    %v26 = vld [vmem:[%s0 + $0x8] sm:$0xff]
    %v27 = vld [vmem:[#allocation2] sm:$0xff]
    %v28 = vld [vmem:[#allocation2 + $0x8] sm:$0xff]
    %v29 = vld [vmem:[#allocation2 + $0x10] sm:$0xff]
    %v30 = vld [vmem:[#allocation2 + $0x18] sm:$0xff]
    %v31 = vld [vmem:[#allocation2 + $0x20] sm:$0xff]
    %v32 = vld [vmem:[#allocation2 + $0x28] sm:$0xff]
    %v33 = vld [vmem:[#allocation2 + $0x30] sm:$0xff]
    %v34 = vld [vmem:[#allocation2 + $0x38] sm:$0xff]
    %v35 = vld [vmem:[#allocation2 + $0x68] sm:$0xff]
    %v36 = vld [vmem:[#allocation2 + $0x70] sm:$0xff]
    %vm37 = vcmask 523264
    %v39 = vsel %vm37, %v25, 0
    %v42 = vsel %vm37, %v26, 0
    %44 = vmatprep.subr.mxu0 0.0
    %45 = vmatpush1.msra.mxu0 0.0
    %46 = vmatprep.subr.mxu0 0.0
    %47 = vmatpush1.msra.mxu0 0.0
    %48 = vmatprep.subr.mxu0 0.0
    %49 = vmatpush1.msra.mxu0 0.0
    %50 = vmatprep.subr.mxu0 0.0
    %51 = vmatpush1.msra.mxu0 0.0
    %52 = vmatprep.subr.mxu0 0.0
    %53 = vmatpush1.msra.mxu0 0.0
    %54 = vmatprep.subr.mxu0 0.0
    %55 = vmatpush1.msra.mxu0 0.0
    %56 = vmatprep.subr.mxu0 0.0
    %57 = vmatpush1.msra.mxu0 0.0
    %58 = vmatprep.subr.mxu0 0.0
    %59 = vmatpush1.msra.mxu0 0.0
    %60 = vmatprep.subr.mxu0 0.0
    %61 = vmatpush1.msra.mxu0 %v34
    %62 = vmatprep.subr.mxu0 0.0
    %63 = vmatpush1.msra.mxu0 %v33
    %64 = vmatprep.subr.mxu0 0.0
    %65 = vmatpush1.msra.mxu0 %v32
    %66 = vmatprep.subr.mxu0 0.0
    %67 = vmatpush1.msra.mxu0 %v31
    %68 = vmatprep.subr.mxu0 0.0
    %69 = vmatpush1.msra.mxu0 %v30
    %70 = vmatprep.subr.mxu0 0.0
    %71 = vmatpush1.msra.mxu0 %v29
    %72 = vmatprep.subr.mxu0 0.0
    %73 = vmatpush1.msra.mxu0 %v28
    %74 = vmatprep.subr.mxu0 0.0
    %75 = vmatpush1.msra.mxu0 %v27
    %76 = vmatprep.subr.mxu0 0.0
    %77 = vmatpush2.msra.mxu0 0.0
    %78 = vmatprep.subr.mxu0 0.0
    %79 = vmatpush2.msra.mxu0 0.0
    %80 = vmatprep.subr.mxu0 0.0
    %81 = vmatpush2.msra.mxu0 0.0
    %82 = vmatprep.subr.mxu0 0.0
    %83 = vmatpush2.msra.mxu0 0.0
    %84 = vmatprep.subr.mxu0 0.0
    %85 = vmatpush2.msra.mxu0 0.0
    %86 = vmatprep.subr.mxu0 0.0
    %87 = vmatpush2.msra.mxu0 0.0
    %88 = vmatprep.subr.mxu0 0.0
    %89 = vmatpush2.msra.mxu0 0.0
    %90 = vmatprep.subr.mxu0 0.0
    %91 = vmatpush2.msra.mxu0 0.0
    %92 = vmatprep.subr.mxu0 0.0
    %93 = vmatpush2.msra.mxu0 0.0
    %94 = vmatprep.subr.mxu0 0.0
    %95 = vmatpush2.msra.mxu0 0.0
    %96 = vmatprep.subr.mxu0 0.0
    %97 = vmatpush2.msra.mxu0 0.0
    %98 = vmatprep.subr.mxu0 0.0
    %99 = vmatpush2.msra.mxu0 0.0
    %100 = vmatprep.subr.mxu0 0.0
    %101 = vmatpush2.msra.mxu0 0.0
    %102 = vmatprep.subr.mxu0 0.0
    %103 = vmatpush2.msra.mxu0 0.0
    %104 = vmatprep.subr.mxu0 0.0
    %105 = vmatpush2.msra.mxu0 0.0
    %106 = vmatprep.subr.mxu0 0.0
    %107 = vmatpush2.msra.mxu0 0.0
    %108 = vmatprep.mubr.f32.mxu0 0.0
    %109 = vmatmul.mubr.f32.gmra.mxu0 %v39
    %v110 = vpop.f32.mrf.mxu0
    %v111 = vadd.f32 %v35, %v110
    %v112 = vpop.f32.mrf.mxu0
    %113 = vmatprep.mubr.f32.mxu0 0.0
    %114 = vmatmul.mubr.f32.gmra.mxu0 %v42
    %v115 = vpop.f32.mrf.mxu0
    %v116 = vadd.f32 %v36, %v115
    %v117 = vpop.f32.mrf.mxu0
    %118 = vdwg.mxu0
    %v119 = vld [vmem:[#allocation2 + $0x78] sm:$0xff]
    %v120 = vld [vmem:[#allocation2 + $0x80] sm:$0xff]
    %v121 = vld [vmem:[#allocation2 + $0x88] sm:$0xff]
    %v122 = vld [vmem:[#allocation2 + $0x90] sm:$0xff]
    %v123 = vld [vmem:[#allocation2 + $0x98] sm:$0xff]
    %v124 = vld [vmem:[#allocation2 + $0xa0] sm:$0xff]
    %v125 = vld [vmem:[#allocation2 + $0xa8] sm:$0xff]
    %v126 = vld [vmem:[#allocation2 + $0xb0] sm:$0xff]
    %v127 = vld [vmem:[#allocation2 + $0xb8] sm:$0xff]
    %v128 = vld [vmem:[#allocation2 + $0xc0] sm:$0xff]
    %v129 = vld [vmem:[#allocation2 + $0xc8] sm:$0xff]
    %v130 = vld [vmem:[#allocation2 + $0xd0] sm:$0xff]
    %v131 = vld [vmem:[#allocation2 + $0xd8] sm:$0xff]
    %v132 = vld [vmem:[#allocation2 + $0xe0] sm:$0xff]
    %v133 = vld [vmem:[#allocation2 + $0xe8] sm:$0xff]
    %v134 = vld [vmem:[#allocation2 + $0xf0] sm:$0xff]
    %v135 = vld [vmem:[#allocation2 + $0xf8] sm:$0xff]
    %v136 = vld [vmem:[#allocation2 + $0x100] sm:$0xff]
    %v137 = vld [vmem:[#allocation2 + $0x108] sm:$0xff]
    %v138 = vld [vmem:[#allocation2 + $0x110] sm:$0xff]
    %v139 = vld [vmem:[#allocation2 + $0x118] sm:$0xff]
    %v140 = vld [vmem:[#allocation2 + $0x120] sm:$0xff]
    %v141 = vld [vmem:[#allocation2 + $0x128] sm:$0x1]
    %v142 = vlaneseq
    %v143 = vshrl.u32 %v142, 7
    %v144 = vsub.s32 0, %v143
    %v145 = vrot.slane %v141, %v144
    %vm146 = vcmask 261120
    %v148 = vsel %vm146, %v111, 0
    %v151 = vsel %vm146, %v116, 0
    %153 = vmatprep.subr.mxu0 0.0
    %154 = vmatpush1.msra.mxu0 0.0
    %155 = vmatprep.subr.mxu0 0.0
    %156 = vmatpush1.msra.mxu0 0.0
    %157 = vmatprep.subr.mxu0 0.0
    %158 = vmatpush1.msra.mxu0 0.0
    %159 = vmatprep.subr.mxu0 0.0
    %160 = vmatpush1.msra.mxu0 0.0
    %161 = vmatprep.subr.mxu0 0.0
    %162 = vmatpush1.msra.mxu0 0.0
    %163 = vmatprep.subr.mxu0 0.0
    %164 = vmatpush1.msra.mxu0 0.0
    %165 = vmatprep.subr.mxu0 0.0
    %166 = vmatpush1.msra.mxu0 0.0
    %167 = vmatprep.subr.mxu0 0.0
    %168 = vmatpush1.msra.mxu0 0.0
    %169 = vmatprep.subr.mxu0 0.0
    %170 = vmatpush1.msra.mxu0 0.0
    %171 = vmatprep.subr.mxu0 0.0
    %172 = vmatpush1.msra.mxu0 0.0
    %173 = vmatprep.subr.mxu0 0.0
    %174 = vmatpush1.msra.mxu0 0.0
    %175 = vmatprep.subr.mxu0 0.0
    %176 = vmatpush1.msra.mxu0 0.0
    %177 = vmatprep.subr.mxu0 0.0
    %178 = vmatpush1.msra.mxu0 %v140
    %179 = vmatprep.subr.mxu0 0.0
    %180 = vmatpush1.msra.mxu0 %v139
    %181 = vmatprep.subr.mxu0 0.0
    %182 = vmatpush1.msra.mxu0 %v138
    %183 = vmatprep.subr.mxu0 0.0
    %184 = vmatpush1.msra.mxu0 %v137
    %185 = vmatprep.subr.mxu0 0.0
    %186 = vmatpush2.msra.mxu0 0.0
    %187 = vmatprep.subr.mxu0 0.0
    %188 = vmatpush2.msra.mxu0 0.0
    %189 = vmatprep.subr.mxu0 0.0
    %190 = vmatpush2.msra.mxu0 0.0
    %191 = vmatprep.subr.mxu0 0.0
    %192 = vmatpush2.msra.mxu0 0.0
    %193 = vmatprep.subr.mxu0 0.0
    %194 = vmatpush2.msra.mxu0 0.0
    %195 = vmatprep.subr.mxu0 0.0
    %196 = vmatpush2.msra.mxu0 0.0
    %197 = vmatprep.subr.mxu0 0.0
    %198 = vmatpush2.msra.mxu0 0.0
    %199 = vmatprep.subr.mxu0 0.0
    %200 = vmatpush2.msra.mxu0 0.0
    %201 = vmatprep.subr.mxu0 0.0
    %202 = vmatpush2.msra.mxu0 0.0
    %203 = vmatprep.subr.mxu0 0.0
    %204 = vmatpush2.msra.mxu0 0.0
    %205 = vmatprep.subr.mxu0 0.0
    %206 = vmatpush2.msra.mxu0 0.0
    %207 = vmatprep.subr.mxu0 0.0
    %208 = vmatpush2.msra.mxu0 0.0
    %209 = vmatprep.subr.mxu0 0.0
    %210 = vmatpush2.msra.mxu0 0.0
    %211 = vmatprep.subr.mxu0 0.0
    %212 = vmatpush2.msra.mxu0 0.0
    %213 = vmatprep.subr.mxu0 0.0
    %214 = vmatpush2.msra.mxu0 0.0
    %215 = vmatprep.subr.mxu0 0.0
    %216 = vmatpush2.msra.mxu0 0.0
    %217 = vmatprep.mubr.f32.mxu0 0.0
    %218 = vmatmul.mubr.f32.gmra.mxu0 %v148
    %v219 = vpop.f32.mrf.mxu0
    %v220 = vadd.f32 %v145, %v219
    %v221 = vpop.f32.mrf.mxu0
    %222 = vmatprep.mubr.f32.mxu0 0.0
    %223 = vmatmul.mubr.f32.gmra.mxu0 %v151
    %v224 = vpop.f32.mrf.mxu0
    %v225 = vadd.f32 %v145, %v224
    %v226 = vpop.f32.mrf.mxu0
    %227 = vdwg.mxu0
    %236 = vrot.lane.b32.xlu0 %v121, 32
    %v237 = vpop.permute.xlu0 %236
    %238 = vrot.lane.b32.xlu0 %v122, 32
    %v239 = vpop.permute.xlu0 %238
    %240 = vrot.lane.b32.xlu0 %v123, 32
    %v241 = vpop.permute.xlu0 %240
    %242 = vrot.lane.b32.xlu0 %v124, 32
    %v243 = vpop.permute.xlu0 %242
    %244 = vrot.lane.b32.xlu0 %v125, 32
    %v245 = vpop.permute.xlu0 %244
    %246 = vrot.lane.b32.xlu0 %v126, 32
    %v247 = vpop.permute.xlu0 %246
    %248 = vrot.lane.b32.xlu0 %v127, 32
    %v249 = vpop.permute.xlu0 %248
    %250 = vrot.lane.b32.xlu0 %v128, 32
    %v251 = vpop.permute.xlu0 %250
    %v260 = vmul.f32 %v220, %v237
    %v261 = vmul.f32 %v225, %v239
    %v262 = vmul.f32 %v220, %v241
    %v263 = vmul.f32 %v225, %v243
    %v264 = vmul.f32 %v220, %v245
    %v265 = vmul.f32 %v225, %v247
    %v266 = vmul.f32 %v220, %v249
    %v267 = vmul.f32 %v225, %v251
    %268 = vrot.lane.b32.xlu0 %v121, 64
    %v269 = vpop.permute.xlu0 %268
    %270 = vrot.lane.b32.xlu0 %v122, 64
    %v271 = vpop.permute.xlu0 %270
    %272 = vrot.lane.b32.xlu0 %v123, 64
    %v273 = vpop.permute.xlu0 %272
    %274 = vrot.lane.b32.xlu0 %v124, 64
    %v275 = vpop.permute.xlu0 %274
    %276 = vrot.lane.b32.xlu0 %v125, 64
    %v277 = vpop.permute.xlu0 %276
    %278 = vrot.lane.b32.xlu0 %v126, 64
    %v279 = vpop.permute.xlu0 %278
    %280 = vrot.lane.b32.xlu0 %v127, 64
    %v281 = vpop.permute.xlu0 %280
    %282 = vrot.lane.b32.xlu0 %v128, 64
    %v283 = vpop.permute.xlu0 %282
    %v292 = vmul.f32 %v220, %v269
    %v293 = vmul.f32 %v225, %v271
    %v294 = vmul.f32 %v220, %v273
    %v295 = vmul.f32 %v225, %v275
    %v296 = vmul.f32 %v220, %v277
    %v297 = vmul.f32 %v225, %v279
    %v298 = vmul.f32 %v220, %v281
    %v299 = vmul.f32 %v225, %v283
    %308 = vrot.lane.b32.xlu0 %v260, 96
    %v309 = vpop.permute.xlu0 %308
    %310 = vrot.lane.b32.xlu0 %v261, 96
    %v311 = vpop.permute.xlu0 %310
    %312 = vrot.lane.b32.xlu0 %v262, 96
    %v313 = vpop.permute.xlu0 %312
    %314 = vrot.lane.b32.xlu0 %v263, 96
    %v315 = vpop.permute.xlu0 %314
    %316 = vrot.lane.b32.xlu0 %v264, 96
    %v317 = vpop.permute.xlu0 %316
    %318 = vrot.lane.b32.xlu0 %v265, 96
    %v319 = vpop.permute.xlu0 %318
    %320 = vrot.lane.b32.xlu0 %v266, 96
    %v321 = vpop.permute.xlu0 %320
    %322 = vrot.lane.b32.xlu0 %v267, 96
    %v323 = vpop.permute.xlu0 %322
    %v325 = vsel %vm146, %v220, 0
    %v328 = vsel %vm146, %v225, 0
    %v330 = vsel %vm146, %v309, 0
    %v332 = vsel %vm146, %v311, 0
    %v334 = vsel %vm146, %v313, 0
    %v336 = vsel %vm146, %v315, 0
    %v338 = vsel %vm146, %v317, 0
    %v340 = vsel %vm146, %v319, 0
    %v342 = vsel %vm146, %v321, 0
    %v344 = vsel %vm146, %v323, 0
    %346 = vmatprep.subr.mxu0 0.0
    %347 = vmatpush1.xpose.msra.mxu0 0.0
    %348 = vmatprep.subr.mxu0 0.0
    %349 = vmatpush1.xpose.msra.mxu0 0.0
    %350 = vmatprep.subr.mxu0 0.0
    %351 = vmatpush1.xpose.msra.mxu0 0.0
    %352 = vmatprep.subr.mxu0 0.0
    %353 = vmatpush1.xpose.msra.mxu0 0.0
    %354 = vmatprep.subr.mxu0 0.0
    %355 = vmatpush1.xpose.msra.mxu0 0.0
    %356 = vmatprep.subr.mxu0 0.0
    %357 = vmatpush1.xpose.msra.mxu0 0.0
    %358 = vmatprep.subr.mxu0 0.0
    %359 = vmatpush1.xpose.msra.mxu0 0.0
    %360 = vmatprep.subr.mxu0 0.0
    %361 = vmatpush1.xpose.msra.mxu0 0.0
    %362 = vmatprep.subr.mxu0 0.0
    %363 = vmatpush1.xpose.msra.mxu0 %v344
    %364 = vmatprep.subr.mxu0 0.0
    %365 = vmatpush1.xpose.msra.mxu0 %v342
    %366 = vmatprep.subr.mxu0 0.0
    %367 = vmatpush1.xpose.msra.mxu0 %v340
    %368 = vmatprep.subr.mxu0 0.0
    %369 = vmatpush1.xpose.msra.mxu0 %v338
    %370 = vmatprep.subr.mxu0 0.0
    %371 = vmatpush1.xpose.msra.mxu0 %v336
    %372 = vmatprep.subr.mxu0 0.0
    %373 = vmatpush1.xpose.msra.mxu0 %v334
    %374 = vmatprep.subr.mxu0 0.0
    %375 = vmatpush1.xpose.msra.mxu0 %v332
    %376 = vmatprep.subr.mxu0 0.0
    %377 = vmatpush1.xpose.msra.mxu0 %v330
    %378 = vmatprep.subr.mxu0 0.0
    %379 = vmatpush2.xpose.msra.mxu0 0.0
    %380 = vmatprep.subr.mxu0 0.0
    %381 = vmatpush2.xpose.msra.mxu0 0.0
    %382 = vmatprep.subr.mxu0 0.0
    %383 = vmatpush2.xpose.msra.mxu0 0.0
    %384 = vmatprep.subr.mxu0 0.0
    %385 = vmatpush2.xpose.msra.mxu0 0.0
    %386 = vmatprep.subr.mxu0 0.0
    %387 = vmatpush2.xpose.msra.mxu0 0.0
    %388 = vmatprep.subr.mxu0 0.0
    %389 = vmatpush2.xpose.msra.mxu0 0.0
    %390 = vmatprep.subr.mxu0 0.0
    %391 = vmatpush2.xpose.msra.mxu0 0.0
    %392 = vmatprep.subr.mxu0 0.0
    %393 = vmatpush2.xpose.msra.mxu0 0.0
    %394 = vmatprep.subr.mxu0 0.0
    %395 = vmatpush2.xpose.msra.mxu0 0.0
    %396 = vmatprep.subr.mxu0 0.0
    %397 = vmatpush2.xpose.msra.mxu0 0.0
    %398 = vmatprep.subr.mxu0 0.0
    %399 = vmatpush2.xpose.msra.mxu0 0.0
    %400 = vmatprep.subr.mxu0 0.0
    %401 = vmatpush2.xpose.msra.mxu0 0.0
    %402 = vmatprep.subr.mxu0 0.0
    %403 = vmatpush2.xpose.msra.mxu0 0.0
    %404 = vmatprep.subr.mxu0 0.0
    %405 = vmatpush2.xpose.msra.mxu0 0.0
    %406 = vmatprep.subr.mxu0 0.0
    %407 = vmatpush2.xpose.msra.mxu0 0.0
    %408 = vmatprep.subr.mxu0 0.0
    %409 = vmatpush2.xpose.msra.mxu0 0.0
    %410 = vmatprep.mubr.f32.mxu0 0.0
    %411 = vmatmul.mubr.f32.gmra.mxu0 %v325
    %v412 = vpop.f32.mrf.mxu0
    %v413 = vadd.f32 %v119, %v412
    %v414 = vpop.f32.mrf.mxu0
    %415 = vmatprep.mubr.f32.mxu0 0.0
    %416 = vmatmul.mubr.f32.gmra.mxu0 %v328
    %v417 = vpop.f32.mrf.mxu0
    %v418 = vadd.f32 %v120, %v417
    %v419 = vpop.f32.mrf.mxu0
    %420 = vdwg.mxu0
    %v421 = vsel %vm37, %v413, -inf
    %422 = vmax.xlane.f32.xlu0 %v421
    %v423 = vpop.xlane.xlu0 %422
    %v424 = vsel %vm37, %v418, -inf
    %425 = vmax.xlane.f32.xlu0 %v424
    %v426 = vpop.xlane.xlu0 %425
    %v427 = vsub.f32 %v413, %v423
    %v428 = vsub.f32 %v418, %v426
    %v429 = vmul.f32 %v427, 1.442695
    %v430 = vpow.pop %v429
    %v431 = vmul.f32 %v428, 1.442695
    %v432 = vpow.pop %v431
    %v434 = vsel %vm37, %v430, 0
    %v437 = vsel %vm37, %v432, 0
    %439 = vmatprep.subr.mxu0 0.0
    %440 = vmatpush1.msra.mxu0 0.0
    %441 = vmatprep.subr.mxu0 0.0
    %442 = vmatpush1.msra.mxu0 0.0
    %443 = vmatprep.subr.mxu0 0.0
    %444 = vmatpush1.msra.mxu0 0.0
    %445 = vmatprep.subr.mxu0 0.0
    %446 = vmatpush1.msra.mxu0 0.0
    %447 = vmatprep.subr.mxu0 0.0
    %448 = vmatpush1.msra.mxu0 0.0
    %449 = vmatprep.subr.mxu0 0.0
    %450 = vmatpush1.msra.mxu0 0.0
    %451 = vmatprep.subr.mxu0 0.0
    %452 = vmatpush1.msra.mxu0 0.0
    %453 = vmatprep.subr.mxu0 0.0
    %454 = vmatpush1.msra.mxu0 0.0
    %455 = vmatprep.subr.mxu0 0.0
    %456 = vmatpush1.msra.mxu0 %v136
    %457 = vmatprep.subr.mxu0 0.0
    %458 = vmatpush1.msra.mxu0 %v135
    %459 = vmatprep.subr.mxu0 0.0
    %460 = vmatpush1.msra.mxu0 %v134
    %461 = vmatprep.subr.mxu0 0.0
    %462 = vmatpush1.msra.mxu0 %v133
    %463 = vmatprep.subr.mxu0 0.0
    %464 = vmatpush1.msra.mxu0 %v132
    %465 = vmatprep.subr.mxu0 0.0
    %466 = vmatpush1.msra.mxu0 %v131
    %467 = vmatprep.subr.mxu0 0.0
    %468 = vmatpush1.msra.mxu0 %v130
    %469 = vmatprep.subr.mxu0 0.0
    %470 = vmatpush1.msra.mxu0 %v129
    %471 = vmatprep.subr.mxu0 0.0
    %472 = vmatpush2.msra.mxu0 0.0
    %473 = vmatprep.subr.mxu0 0.0
    %474 = vmatpush2.msra.mxu0 0.0
    %475 = vmatprep.subr.mxu0 0.0
    %476 = vmatpush2.msra.mxu0 0.0
    %477 = vmatprep.subr.mxu0 0.0
    %478 = vmatpush2.msra.mxu0 0.0
    %479 = vmatprep.subr.mxu0 0.0
    %480 = vmatpush2.msra.mxu0 0.0
    %481 = vmatprep.subr.mxu0 0.0
    %482 = vmatpush2.msra.mxu0 0.0
    %483 = vmatprep.subr.mxu0 0.0
    %484 = vmatpush2.msra.mxu0 0.0
    %485 = vmatprep.subr.mxu0 0.0
    %486 = vmatpush2.msra.mxu0 0.0
    %487 = vmatprep.subr.mxu0 0.0
    %488 = vmatpush2.msra.mxu0 0.0
    %489 = vmatprep.subr.mxu0 0.0
    %490 = vmatpush2.msra.mxu0 0.0
    %491 = vmatprep.subr.mxu0 0.0
    %492 = vmatpush2.msra.mxu0 0.0
    %493 = vmatprep.subr.mxu0 0.0
    %494 = vmatpush2.msra.mxu0 0.0
    %495 = vmatprep.subr.mxu0 0.0
    %496 = vmatpush2.msra.mxu0 0.0
    %497 = vmatprep.subr.mxu0 0.0
    %498 = vmatpush2.msra.mxu0 0.0
    %499 = vmatprep.subr.mxu0 0.0
    %500 = vmatpush2.msra.mxu0 0.0
    %501 = vmatprep.subr.mxu0 0.0
    %502 = vmatpush2.msra.mxu0 0.0
    %503 = vmatprep.mubr.f32.mxu0 0.0
    %504 = vmatmul.mubr.f32.gmra.mxu0 %v434
    %v505 = vpop.f32.mrf.mxu0
    %v506 = vadd.f32 0.0, %v505
    %v507 = vpop.f32.mrf.mxu0
    %508 = vmatprep.mubr.f32.mxu0 0.0
    %509 = vmatmul.mubr.f32.gmra.mxu0 %v437
    %v510 = vpop.f32.mrf.mxu0
    %v511 = vadd.f32 0.0, %v510
    %v512 = vpop.f32.mrf.mxu0
    %513 = vdwg.mxu0
    %v514 = vmax.f32 %v506, 1e-30
    %v515 = vmax.f32 %v511, 1e-30
    %v516 = vrcp.pop %v514
    %v517 = vmul.f32 %v430, %v516
    %v518 = vrcp.pop %v515
    %v519 = vmul.f32 %v432, %v518
    %528 = vrot.lane.b32.xlu0 %v292, 64
    %v529 = vpop.permute.xlu0 %528
    %530 = vrot.lane.b32.xlu0 %v293, 64
    %v531 = vpop.permute.xlu0 %530
    %532 = vrot.lane.b32.xlu0 %v294, 64
    %v533 = vpop.permute.xlu0 %532
    %534 = vrot.lane.b32.xlu0 %v295, 64
    %v535 = vpop.permute.xlu0 %534
    %536 = vrot.lane.b32.xlu0 %v296, 64
    %v537 = vpop.permute.xlu0 %536
    %538 = vrot.lane.b32.xlu0 %v297, 64
    %v539 = vpop.permute.xlu0 %538
    %540 = vrot.lane.b32.xlu0 %v298, 64
    %v541 = vpop.permute.xlu0 %540
    %542 = vrot.lane.b32.xlu0 %v299, 64
    %v543 = vpop.permute.xlu0 %542
    %v553 = vsel %vm37, %v517, 0
    %v556 = vsel %vm37, %v519, 0
    %558 = vmatprep.subr.mxu0 0.0
    %559 = vmatpush1.msra.mxu0 0.0
    %560 = vmatprep.subr.mxu0 0.0
    %561 = vmatpush1.msra.mxu0 0.0
    %562 = vmatprep.subr.mxu0 0.0
    %563 = vmatpush1.msra.mxu0 0.0
    %564 = vmatprep.subr.mxu0 0.0
    %565 = vmatpush1.msra.mxu0 0.0
    %566 = vmatprep.subr.mxu0 0.0
    %567 = vmatpush1.msra.mxu0 0.0
    %568 = vmatprep.subr.mxu0 0.0
    %569 = vmatpush1.msra.mxu0 0.0
    %570 = vmatprep.subr.mxu0 0.0
    %571 = vmatpush1.msra.mxu0 0.0
    %572 = vmatprep.subr.mxu0 0.0
    %573 = vmatpush1.msra.mxu0 0.0
    %574 = vmatprep.subr.mxu0 0.0
    %575 = vmatpush1.msra.mxu0 %v543
    %576 = vmatprep.subr.mxu0 0.0
    %577 = vmatpush1.msra.mxu0 %v541
    %578 = vmatprep.subr.mxu0 0.0
    %579 = vmatpush1.msra.mxu0 %v539
    %580 = vmatprep.subr.mxu0 0.0
    %581 = vmatpush1.msra.mxu0 %v537
    %582 = vmatprep.subr.mxu0 0.0
    %583 = vmatpush1.msra.mxu0 %v535
    %584 = vmatprep.subr.mxu0 0.0
    %585 = vmatpush1.msra.mxu0 %v533
    %586 = vmatprep.subr.mxu0 0.0
    %587 = vmatpush1.msra.mxu0 %v531
    %588 = vmatprep.subr.mxu0 0.0
    %589 = vmatpush1.msra.mxu0 %v529
    %590 = vmatprep.subr.mxu0 0.0
    %591 = vmatpush2.msra.mxu0 0.0
    %592 = vmatprep.subr.mxu0 0.0
    %593 = vmatpush2.msra.mxu0 0.0
    %594 = vmatprep.subr.mxu0 0.0
    %595 = vmatpush2.msra.mxu0 0.0
    %596 = vmatprep.subr.mxu0 0.0
    %597 = vmatpush2.msra.mxu0 0.0
    %598 = vmatprep.subr.mxu0 0.0
    %599 = vmatpush2.msra.mxu0 0.0
    %600 = vmatprep.subr.mxu0 0.0
    %601 = vmatpush2.msra.mxu0 0.0
    %602 = vmatprep.subr.mxu0 0.0
    %603 = vmatpush2.msra.mxu0 0.0
    %604 = vmatprep.subr.mxu0 0.0
    %605 = vmatpush2.msra.mxu0 0.0
    %606 = vmatprep.subr.mxu0 0.0
    %607 = vmatpush2.msra.mxu0 0.0
    %608 = vmatprep.subr.mxu0 0.0
    %609 = vmatpush2.msra.mxu0 0.0
    %610 = vmatprep.subr.mxu0 0.0
    %611 = vmatpush2.msra.mxu0 0.0
    %612 = vmatprep.subr.mxu0 0.0
    %613 = vmatpush2.msra.mxu0 0.0
    %614 = vmatprep.subr.mxu0 0.0
    %615 = vmatpush2.msra.mxu0 0.0
    %616 = vmatprep.subr.mxu0 0.0
    %617 = vmatpush2.msra.mxu0 0.0
    %618 = vmatprep.subr.mxu0 0.0
    %619 = vmatpush2.msra.mxu0 0.0
    %620 = vmatprep.subr.mxu0 0.0
    %621 = vmatpush2.msra.mxu0 0.0
    %622 = vmatprep.mubr.f32.mxu0 0.0
    %623 = vmatmul.mubr.f32.gmra.mxu0 %v553
    %v624 = vpop.f32.mrf.mxu0
    %v625 = vadd.f32 0.0, %v624
    %v626 = vpop.f32.mrf.mxu0
    %627 = vmatprep.mubr.f32.mxu0 0.0
    %628 = vmatmul.mubr.f32.gmra.mxu0 %v556
    %v629 = vpop.f32.mrf.mxu0
    %v630 = vadd.f32 0.0, %v629
    %v631 = vpop.f32.mrf.mxu0
    %632 = vdwg.mxu0
    %v633 = vld [vmem:[#allocation2 + $0x130] sm:$0xff]
    %v634 = vld [vmem:[#allocation2 + $0x138] sm:$0xff]
    %v635 = vld [vmem:[#allocation2 + $0x140] sm:$0xff]
    %v636 = vld [vmem:[#allocation2 + $0x148] sm:$0xff]
    %v637 = vld [vmem:[#allocation2 + $0x150] sm:$0x1]
    %v638 = vlaneseq
    %v639 = vshrl.u32 %v638, 7
    %v640 = vsub.s32 0, %v639
    %v641 = vrot.slane %v637, %v640
    %v643 = vsel %vm146, %v625, 0
    %v646 = vsel %vm146, %v630, 0
    %648 = vmatprep.subr.mxu0 0.0
    %649 = vmatpush1.msra.mxu0 0.0
    %650 = vmatprep.subr.mxu0 0.0
    %651 = vmatpush1.msra.mxu0 0.0
    %652 = vmatprep.subr.mxu0 0.0
    %653 = vmatpush1.msra.mxu0 0.0
    %654 = vmatprep.subr.mxu0 0.0
    %655 = vmatpush1.msra.mxu0 0.0
    %656 = vmatprep.subr.mxu0 0.0
    %657 = vmatpush1.msra.mxu0 0.0
    %658 = vmatprep.subr.mxu0 0.0
    %659 = vmatpush1.msra.mxu0 0.0
    %660 = vmatprep.subr.mxu0 0.0
    %661 = vmatpush1.msra.mxu0 0.0
    %662 = vmatprep.subr.mxu0 0.0
    %663 = vmatpush1.msra.mxu0 0.0
    %664 = vmatprep.subr.mxu0 0.0
    %665 = vmatpush1.msra.mxu0 0.0
    %666 = vmatprep.subr.mxu0 0.0
    %667 = vmatpush1.msra.mxu0 0.0
    %668 = vmatprep.subr.mxu0 0.0
    %669 = vmatpush1.msra.mxu0 0.0
    %670 = vmatprep.subr.mxu0 0.0
    %671 = vmatpush1.msra.mxu0 0.0
    %672 = vmatprep.subr.mxu0 0.0
    %673 = vmatpush1.msra.mxu0 %v636
    %674 = vmatprep.subr.mxu0 0.0
    %675 = vmatpush1.msra.mxu0 %v635
    %676 = vmatprep.subr.mxu0 0.0
    %677 = vmatpush1.msra.mxu0 %v634
    %678 = vmatprep.subr.mxu0 0.0
    %679 = vmatpush1.msra.mxu0 %v633
    %680 = vmatprep.subr.mxu0 0.0
    %681 = vmatpush2.msra.mxu0 0.0
    %682 = vmatprep.subr.mxu0 0.0
    %683 = vmatpush2.msra.mxu0 0.0
    %684 = vmatprep.subr.mxu0 0.0
    %685 = vmatpush2.msra.mxu0 0.0
    %686 = vmatprep.subr.mxu0 0.0
    %687 = vmatpush2.msra.mxu0 0.0
    %688 = vmatprep.subr.mxu0 0.0
    %689 = vmatpush2.msra.mxu0 0.0
    %690 = vmatprep.subr.mxu0 0.0
    %691 = vmatpush2.msra.mxu0 0.0
    %692 = vmatprep.subr.mxu0 0.0
    %693 = vmatpush2.msra.mxu0 0.0
    %694 = vmatprep.subr.mxu0 0.0
    %695 = vmatpush2.msra.mxu0 0.0
    %696 = vmatprep.subr.mxu0 0.0
    %697 = vmatpush2.msra.mxu0 0.0
    %698 = vmatprep.subr.mxu0 0.0
    %699 = vmatpush2.msra.mxu0 0.0
    %700 = vmatprep.subr.mxu0 0.0
    %701 = vmatpush2.msra.mxu0 0.0
    %702 = vmatprep.subr.mxu0 0.0
    %703 = vmatpush2.msra.mxu0 0.0
    %704 = vmatprep.subr.mxu0 0.0
    %705 = vmatpush2.msra.mxu0 0.0
    %706 = vmatprep.subr.mxu0 0.0
    %707 = vmatpush2.msra.mxu0 0.0
    %708 = vmatprep.subr.mxu0 0.0
    %709 = vmatpush2.msra.mxu0 0.0
    %710 = vmatprep.subr.mxu0 0.0
    %711 = vmatpush2.msra.mxu0 0.0
    %712 = vmatprep.mubr.f32.mxu0 0.0
    %713 = vmatmul.mubr.f32.gmra.mxu0 %v643
    %v714 = vpop.f32.mrf.mxu0
    %v715 = vadd.f32 %v641, %v714
    %v716 = vpop.f32.mrf.mxu0
    %717 = vmatprep.mubr.f32.mxu0 0.0
    %718 = vmatmul.mubr.f32.gmra.mxu0 %v646
    %v719 = vpop.f32.mrf.mxu0
    %v720 = vadd.f32 %v641, %v719
    %v721 = vpop.f32.mrf.mxu0
    %722 = vdwg.mxu0
    %v723 = vadd.f32 %v111, %v715
    %v724 = vadd.f32 %v116, %v720
    %v725 = vld [vmem:[#allocation2 + $0x1c8] sm:$0x1]
    %v726 = vld [vmem:[#allocation2 + $0x1d0] sm:$0x1]
    %v727 = vsel %vm146, %v723, 0.0
    %728 = vadd.xlane.f32.xlu0 %v727
    %v729 = vpop.xlane.xlu0 %728
    %v730 = vsel %vm146, %v724, 0.0
    %731 = vadd.xlane.f32.xlu0 %v730
    %v732 = vpop.xlane.xlu0 %731
    %v733 = vrcp.pop 32.0
    %v734 = vmul.f32 %v729, %v733
    %v735 = vmul.f32 %v732, %v733
    %v736 = vsub.f32 %v723, %v734
    %v737 = vsub.f32 %v724, %v735
    %v738 = vmul.f32 %v736, %v736
    %v739 = vmul.f32 %v737, %v737
    %v740 = vsel %vm146, %v738, 0.0
    %741 = vadd.xlane.f32.xlu0 %v740
    %v742 = vpop.xlane.xlu0 %741
    %v743 = vsel %vm146, %v739, 0.0
    %744 = vadd.xlane.f32.xlu0 %v743
    %v745 = vpop.xlane.xlu0 %744
    %v746 = vmul.f32 %v742, %v733
    %v747 = vmul.f32 %v745, %v733
    %v748 = vadd.f32 %v746, 1e-05
    %v749 = vadd.f32 %v747, 1e-05
    %v750 = vrsqrt.pop %v748
    %v751 = vrsqrt.pop %v749
    %v752 = vmul.f32 %v736, %v750
    %v753 = vmul.f32 %v737, %v751
    %v754 = vlaneseq
    %v755 = vshrl.u32 %v754, 7
    %v756 = vsub.s32 0, %v755
    %v757 = vrot.slane %v725, %v756
    %v758 = vmul.f32 %v752, %v757
    %v759 = vmul.f32 %v753, %v757
    %v760 = vlaneseq
    %v761 = vshrl.u32 %v760, 7
    %v762 = vsub.s32 0, %v761
    %v763 = vrot.slane %v726, %v762
    %v764 = vadd.f32 %v758, %v763
    %v765 = vadd.f32 %v759, %v763
    %v766 = vld [vmem:[#allocation2 + $0x158] sm:$0xff]
    %v767 = vld [vmem:[#allocation2 + $0x160] sm:$0xff]
    %v768 = vld [vmem:[#allocation2 + $0x168] sm:$0xff]
    %v769 = vld [vmem:[#allocation2 + $0x170] sm:$0xff]
    %v770 = vld [vmem:[#allocation2 + $0x178] sm:$0x1]
    %v771 = vlaneseq
    %v772 = vshrl.u32 %v771, 7
    %v773 = vsub.s32 0, %v772
    %v774 = vrot.slane %v770, %v773
    %v776 = vsel %vm146, %v764, 0
    %v779 = vsel %vm146, %v765, 0
    %781 = vmatprep.subr.mxu0 0.0
    %782 = vmatpush1.msra.mxu0 0.0
    %783 = vmatprep.subr.mxu0 0.0
    %784 = vmatpush1.msra.mxu0 0.0
    %785 = vmatprep.subr.mxu0 0.0
    %786 = vmatpush1.msra.mxu0 0.0
    %787 = vmatprep.subr.mxu0 0.0
    %788 = vmatpush1.msra.mxu0 0.0
    %789 = vmatprep.subr.mxu0 0.0
    %790 = vmatpush1.msra.mxu0 0.0
    %791 = vmatprep.subr.mxu0 0.0
    %792 = vmatpush1.msra.mxu0 0.0
    %793 = vmatprep.subr.mxu0 0.0
    %794 = vmatpush1.msra.mxu0 0.0
    %795 = vmatprep.subr.mxu0 0.0
    %796 = vmatpush1.msra.mxu0 0.0
    %797 = vmatprep.subr.mxu0 0.0
    %798 = vmatpush1.msra.mxu0 0.0
    %799 = vmatprep.subr.mxu0 0.0
    %800 = vmatpush1.msra.mxu0 0.0
    %801 = vmatprep.subr.mxu0 0.0
    %802 = vmatpush1.msra.mxu0 0.0
    %803 = vmatprep.subr.mxu0 0.0
    %804 = vmatpush1.msra.mxu0 0.0
    %805 = vmatprep.subr.mxu0 0.0
    %806 = vmatpush1.msra.mxu0 %v769
    %807 = vmatprep.subr.mxu0 0.0
    %808 = vmatpush1.msra.mxu0 %v768
    %809 = vmatprep.subr.mxu0 0.0
    %810 = vmatpush1.msra.mxu0 %v767
    %811 = vmatprep.subr.mxu0 0.0
    %812 = vmatpush1.msra.mxu0 %v766
    %813 = vmatprep.subr.mxu0 0.0
    %814 = vmatpush2.msra.mxu0 0.0
    %815 = vmatprep.subr.mxu0 0.0
    %816 = vmatpush2.msra.mxu0 0.0
    %817 = vmatprep.subr.mxu0 0.0
    %818 = vmatpush2.msra.mxu0 0.0
    %819 = vmatprep.subr.mxu0 0.0
    %820 = vmatpush2.msra.mxu0 0.0
    %821 = vmatprep.subr.mxu0 0.0
    %822 = vmatpush2.msra.mxu0 0.0
    %823 = vmatprep.subr.mxu0 0.0
    %824 = vmatpush2.msra.mxu0 0.0
    %825 = vmatprep.subr.mxu0 0.0
    %826 = vmatpush2.msra.mxu0 0.0
    %827 = vmatprep.subr.mxu0 0.0
    %828 = vmatpush2.msra.mxu0 0.0
    %829 = vmatprep.subr.mxu0 0.0
    %830 = vmatpush2.msra.mxu0 0.0
    %831 = vmatprep.subr.mxu0 0.0
    %832 = vmatpush2.msra.mxu0 0.0
    %833 = vmatprep.subr.mxu0 0.0
    %834 = vmatpush2.msra.mxu0 0.0
    %835 = vmatprep.subr.mxu0 0.0
    %836 = vmatpush2.msra.mxu0 0.0
    %837 = vmatprep.subr.mxu0 0.0
    %838 = vmatpush2.msra.mxu0 0.0
    %839 = vmatprep.subr.mxu0 0.0
    %840 = vmatpush2.msra.mxu0 0.0
    %841 = vmatprep.subr.mxu0 0.0
    %842 = vmatpush2.msra.mxu0 0.0
    %843 = vmatprep.subr.mxu0 0.0
    %844 = vmatpush2.msra.mxu0 0.0
    %845 = vmatprep.mubr.f32.mxu0 0.0
    %846 = vmatmul.mubr.f32.gmra.mxu0 %v776
    %v847 = vpop.f32.mrf.mxu0
    %v848 = vadd.f32 %v774, %v847
    %v849 = vpop.f32.mrf.mxu0
    %850 = vmatprep.mubr.f32.mxu0 0.0
    %851 = vmatmul.mubr.f32.gmra.mxu0 %v779
    %v852 = vpop.f32.mrf.mxu0
    %v853 = vadd.f32 %v774, %v852
    %v854 = vpop.f32.mrf.mxu0
    %855 = vdwg.mxu0
    %v856 = vmax.f32 %v848, 0.0
    %v857 = vmax.f32 %v853, 0.0
    %v858 = vld [vmem:[#allocation2 + $0x180] sm:$0xff]
    %v859 = vld [vmem:[#allocation2 + $0x188] sm:$0xff]
    %v860 = vld [vmem:[#allocation2 + $0x190] sm:$0xff]
    %v861 = vld [vmem:[#allocation2 + $0x198] sm:$0xff]
    %v862 = vld [vmem:[#allocation2 + $0x1a0] sm:$0xff]
    %v863 = vld [vmem:[#allocation2 + $0x1a8] sm:$0xff]
    %v864 = vld [vmem:[#allocation2 + $0x1b0] sm:$0xff]
    %v865 = vld [vmem:[#allocation2 + $0x1b8] sm:$0xff]
    %v866 = vld [vmem:[#allocation2 + $0x1c0] sm:$0x1]
    %v867 = vlaneseq
    %v868 = vshrl.u32 %v867, 7
    %v869 = vsub.s32 0, %v868
    %v870 = vrot.slane %v866, %v869
    %v872 = vsel %vm37, %v856, 0
    %v875 = vsel %vm37, %v857, 0
    %877 = vmatprep.subr.mxu0 0.0
    %878 = vmatpush1.msra.mxu0 0.0
    %879 = vmatprep.subr.mxu0 0.0
    %880 = vmatpush1.msra.mxu0 0.0
    %881 = vmatprep.subr.mxu0 0.0
    %882 = vmatpush1.msra.mxu0 0.0
    %883 = vmatprep.subr.mxu0 0.0
    %884 = vmatpush1.msra.mxu0 0.0
    %885 = vmatprep.subr.mxu0 0.0
    %886 = vmatpush1.msra.mxu0 0.0
    %887 = vmatprep.subr.mxu0 0.0
    %888 = vmatpush1.msra.mxu0 0.0
    %889 = vmatprep.subr.mxu0 0.0
    %890 = vmatpush1.msra.mxu0 0.0
    %891 = vmatprep.subr.mxu0 0.0
    %892 = vmatpush1.msra.mxu0 0.0
    %893 = vmatprep.subr.mxu0 0.0
    %894 = vmatpush1.msra.mxu0 %v865
    %895 = vmatprep.subr.mxu0 0.0
    %896 = vmatpush1.msra.mxu0 %v864
    %897 = vmatprep.subr.mxu0 0.0
    %898 = vmatpush1.msra.mxu0 %v863
    %899 = vmatprep.subr.mxu0 0.0
    %900 = vmatpush1.msra.mxu0 %v862
    %901 = vmatprep.subr.mxu0 0.0
    %902 = vmatpush1.msra.mxu0 %v861
    %903 = vmatprep.subr.mxu0 0.0
    %904 = vmatpush1.msra.mxu0 %v860
    %905 = vmatprep.subr.mxu0 0.0
    %906 = vmatpush1.msra.mxu0 %v859
    %907 = vmatprep.subr.mxu0 0.0
    %908 = vmatpush1.msra.mxu0 %v858
    %909 = vmatprep.subr.mxu0 0.0
    %910 = vmatpush2.msra.mxu0 0.0
    %911 = vmatprep.subr.mxu0 0.0
    %912 = vmatpush2.msra.mxu0 0.0
    %913 = vmatprep.subr.mxu0 0.0
    %914 = vmatpush2.msra.mxu0 0.0
    %915 = vmatprep.subr.mxu0 0.0
    %916 = vmatpush2.msra.mxu0 0.0
    %917 = vmatprep.subr.mxu0 0.0
    %918 = vmatpush2.msra.mxu0 0.0
    %919 = vmatprep.subr.mxu0 0.0
    %920 = vmatpush2.msra.mxu0 0.0
    %921 = vmatprep.subr.mxu0 0.0
    %922 = vmatpush2.msra.mxu0 0.0
    %923 = vmatprep.subr.mxu0 0.0
    %924 = vmatpush2.msra.mxu0 0.0
    %925 = vmatprep.subr.mxu0 0.0
    %926 = vmatpush2.msra.mxu0 0.0
    %927 = vmatprep.subr.mxu0 0.0
    %928 = vmatpush2.msra.mxu0 0.0
    %929 = vmatprep.subr.mxu0 0.0
    %930 = vmatpush2.msra.mxu0 0.0
    %931 = vmatprep.subr.mxu0 0.0
    %932 = vmatpush2.msra.mxu0 0.0
    %933 = vmatprep.subr.mxu0 0.0
    %934 = vmatpush2.msra.mxu0 0.0
    %935 = vmatprep.subr.mxu0 0.0
    %936 = vmatpush2.msra.mxu0 0.0
    %937 = vmatprep.subr.mxu0 0.0
    %938 = vmatpush2.msra.mxu0 0.0
    %939 = vmatprep.subr.mxu0 0.0
    %940 = vmatpush2.msra.mxu0 0.0
    %941 = vmatprep.mubr.f32.mxu0 0.0
    %942 = vmatmul.mubr.f32.gmra.mxu0 %v872
    %v943 = vpop.f32.mrf.mxu0
    %v944 = vadd.f32 %v870, %v943
    %v945 = vpop.f32.mrf.mxu0
    %946 = vmatprep.mubr.f32.mxu0 0.0
    %947 = vmatmul.mubr.f32.gmra.mxu0 %v875
    %v948 = vpop.f32.mrf.mxu0
    %v949 = vadd.f32 %v870, %v948
    %v950 = vpop.f32.mrf.mxu0
    %951 = vdwg.mxu0
    %v952 = vadd.f32 %v764, %v944
    %v953 = vadd.f32 %v765, %v949
    %v954 = vld [vmem:[#allocation2 + $0x1d8] sm:$0x1]
    %v955 = vld [vmem:[#allocation2 + $0x1e0] sm:$0x1]
    %v956 = vsel %vm146, %v952, 0.0
    %957 = vadd.xlane.f32.xlu0 %v956
    %v958 = vpop.xlane.xlu0 %957
    %v959 = vsel %vm146, %v953, 0.0
    %960 = vadd.xlane.f32.xlu0 %v959
    %v961 = vpop.xlane.xlu0 %960
    %v962 = vmul.f32 %v958, %v733
    %v963 = vmul.f32 %v961, %v733
    %v964 = vsub.f32 %v952, %v962
    %v965 = vsub.f32 %v953, %v963
    %v966 = vmul.f32 %v964, %v964
    %v967 = vmul.f32 %v965, %v965
    %v968 = vsel %vm146, %v966, 0.0
    %969 = vadd.xlane.f32.xlu0 %v968
    %v970 = vpop.xlane.xlu0 %969
    %v971 = vsel %vm146, %v967, 0.0
    %972 = vadd.xlane.f32.xlu0 %v971
    %v973 = vpop.xlane.xlu0 %972
    %v974 = vmul.f32 %v970, %v733
    %v975 = vmul.f32 %v973, %v733
    %v976 = vadd.f32 %v974, 1e-05
    %v977 = vadd.f32 %v975, 1e-05
    %v978 = vrsqrt.pop %v976
    %v979 = vrsqrt.pop %v977
    %v980 = vmul.f32 %v964, %v978
    %v981 = vmul.f32 %v965, %v979
    %v982 = vlaneseq
    %v983 = vshrl.u32 %v982, 7
    %v984 = vsub.s32 0, %v983
    %v985 = vrot.slane %v954, %v984
    %v986 = vmul.f32 %v980, %v985
    %v987 = vmul.f32 %v981, %v985
    %v988 = vlaneseq
    %v989 = vshrl.u32 %v988, 7
    %v990 = vsub.s32 0, %v989
    %v991 = vrot.slane %v955, %v990
    %v992 = vadd.f32 %v986, %v991
    %v993 = vadd.f32 %v987, %v991
    %v994 = vld [vmem:[#allocation2 + $0x1e8] sm:$0xff]
    %v995 = vld [vmem:[#allocation2 + $0x1f0] sm:$0xff]
    %v996 = vld [vmem:[#allocation2 + $0x1f8] sm:$0xff]
    %v997 = vld [vmem:[#allocation2 + $0x200] sm:$0xff]
    %v998 = vld [vmem:[#allocation2 + $0x208] sm:$0x1]
    %v999 = vlaneseq
    %v1000 = vshrl.u32 %v999, 7
    %v1001 = vsub.s32 0, %v1000
    %v1002 = vrot.slane %v998, %v1001
    %v1004 = vsel %vm146, %v992, 0
    %v1007 = vsel %vm146, %v993, 0
    %1009 = vmatprep.subr.mxu0 0.0
    %1010 = vmatpush1.msra.mxu0 0.0
    %1011 = vmatprep.subr.mxu0 0.0
    %1012 = vmatpush1.msra.mxu0 0.0
    %1013 = vmatprep.subr.mxu0 0.0
    %1014 = vmatpush1.msra.mxu0 0.0
    %1015 = vmatprep.subr.mxu0 0.0
    %1016 = vmatpush1.msra.mxu0 0.0
    %1017 = vmatprep.subr.mxu0 0.0
    %1018 = vmatpush1.msra.mxu0 0.0
    %1019 = vmatprep.subr.mxu0 0.0
    %1020 = vmatpush1.msra.mxu0 0.0
    %1021 = vmatprep.subr.mxu0 0.0
    %1022 = vmatpush1.msra.mxu0 0.0
    %1023 = vmatprep.subr.mxu0 0.0
    %1024 = vmatpush1.msra.mxu0 0.0
    %1025 = vmatprep.subr.mxu0 0.0
    %1026 = vmatpush1.msra.mxu0 0.0
    %1027 = vmatprep.subr.mxu0 0.0
    %1028 = vmatpush1.msra.mxu0 0.0
    %1029 = vmatprep.subr.mxu0 0.0
    %1030 = vmatpush1.msra.mxu0 0.0
    %1031 = vmatprep.subr.mxu0 0.0
    %1032 = vmatpush1.msra.mxu0 0.0
    %1033 = vmatprep.subr.mxu0 0.0
    %1034 = vmatpush1.msra.mxu0 %v997
    %1035 = vmatprep.subr.mxu0 0.0
    %1036 = vmatpush1.msra.mxu0 %v996
    %1037 = vmatprep.subr.mxu0 0.0
    %1038 = vmatpush1.msra.mxu0 %v995
    %1039 = vmatprep.subr.mxu0 0.0
    %1040 = vmatpush1.msra.mxu0 %v994
    %1041 = vmatprep.subr.mxu0 0.0
    %1042 = vmatpush2.msra.mxu0 0.0
    %1043 = vmatprep.subr.mxu0 0.0
    %1044 = vmatpush2.msra.mxu0 0.0
    %1045 = vmatprep.subr.mxu0 0.0
    %1046 = vmatpush2.msra.mxu0 0.0
    %1047 = vmatprep.subr.mxu0 0.0
    %1048 = vmatpush2.msra.mxu0 0.0
    %1049 = vmatprep.subr.mxu0 0.0
    %1050 = vmatpush2.msra.mxu0 0.0
    %1051 = vmatprep.subr.mxu0 0.0
    %1052 = vmatpush2.msra.mxu0 0.0
    %1053 = vmatprep.subr.mxu0 0.0
    %1054 = vmatpush2.msra.mxu0 0.0
    %1055 = vmatprep.subr.mxu0 0.0
    %1056 = vmatpush2.msra.mxu0 0.0
    %1057 = vmatprep.subr.mxu0 0.0
    %1058 = vmatpush2.msra.mxu0 0.0
    %1059 = vmatprep.subr.mxu0 0.0
    %1060 = vmatpush2.msra.mxu0 0.0
    %1061 = vmatprep.subr.mxu0 0.0
    %1062 = vmatpush2.msra.mxu0 0.0
    %1063 = vmatprep.subr.mxu0 0.0
    %1064 = vmatpush2.msra.mxu0 0.0
    %1065 = vmatprep.subr.mxu0 0.0
    %1066 = vmatpush2.msra.mxu0 0.0
    %1067 = vmatprep.subr.mxu0 0.0
    %1068 = vmatpush2.msra.mxu0 0.0
    %1069 = vmatprep.subr.mxu0 0.0
    %1070 = vmatpush2.msra.mxu0 0.0
    %1071 = vmatprep.subr.mxu0 0.0
    %1072 = vmatpush2.msra.mxu0 0.0
    %1073 = vmatprep.mubr.f32.mxu0 0.0
    %1074 = vmatmul.mubr.f32.gmra.mxu0 %v1004
    %v1075 = vpop.f32.mrf.mxu0
    %v1076 = vadd.f32 %v1002, %v1075
    %v1077 = vpop.f32.mrf.mxu0
    %1078 = vmatprep.mubr.f32.mxu0 0.0
    %1079 = vmatmul.mubr.f32.gmra.mxu0 %v1007
    %v1080 = vpop.f32.mrf.mxu0
    %v1081 = vadd.f32 %v1002, %v1080
    %v1082 = vpop.f32.mrf.mxu0
    %1083 = vdwg.mxu0
    %v1084 = vmul.f32 %v1076, %v237
    %v1085 = vmul.f32 %v1081, %v239
    %v1086 = vmul.f32 %v1076, %v241
    %v1087 = vmul.f32 %v1081, %v243
    %v1088 = vmul.f32 %v1076, %v245
    %v1089 = vmul.f32 %v1081, %v247
    %v1090 = vmul.f32 %v1076, %v249
    %v1091 = vmul.f32 %v1081, %v251
    %v1092 = vmul.f32 %v1076, %v269
    %v1093 = vmul.f32 %v1081, %v271
    %v1094 = vmul.f32 %v1076, %v273
    %v1095 = vmul.f32 %v1081, %v275
    %v1096 = vmul.f32 %v1076, %v277
    %v1097 = vmul.f32 %v1081, %v279
    %v1098 = vmul.f32 %v1076, %v281
    %v1099 = vmul.f32 %v1081, %v283
    %1108 = vrot.lane.b32.xlu0 %v1084, 96
    %v1109 = vpop.permute.xlu0 %1108
    %1110 = vrot.lane.b32.xlu0 %v1085, 96
    %v1111 = vpop.permute.xlu0 %1110
    %1112 = vrot.lane.b32.xlu0 %v1086, 96
    %v1113 = vpop.permute.xlu0 %1112
    %1114 = vrot.lane.b32.xlu0 %v1087, 96
    %v1115 = vpop.permute.xlu0 %1114
    %1116 = vrot.lane.b32.xlu0 %v1088, 96
    %v1117 = vpop.permute.xlu0 %1116
    %1118 = vrot.lane.b32.xlu0 %v1089, 96
    %v1119 = vpop.permute.xlu0 %1118
    %1120 = vrot.lane.b32.xlu0 %v1090, 96
    %v1121 = vpop.permute.xlu0 %1120
    %1122 = vrot.lane.b32.xlu0 %v1091, 96
    %v1123 = vpop.permute.xlu0 %1122
    %v1125 = vsel %vm146, %v1076, 0
    %v1128 = vsel %vm146, %v1081, 0
    %v1130 = vsel %vm146, %v1109, 0
    %v1132 = vsel %vm146, %v1111, 0
    %v1134 = vsel %vm146, %v1113, 0
    %v1136 = vsel %vm146, %v1115, 0
    %v1138 = vsel %vm146, %v1117, 0
    %v1140 = vsel %vm146, %v1119, 0
    %v1142 = vsel %vm146, %v1121, 0
    %v1144 = vsel %vm146, %v1123, 0
    %1146 = vmatprep.subr.mxu0 0.0
    %1147 = vmatpush1.xpose.msra.mxu0 0.0
    %1148 = vmatprep.subr.mxu0 0.0
    %1149 = vmatpush1.xpose.msra.mxu0 0.0
    %1150 = vmatprep.subr.mxu0 0.0
    %1151 = vmatpush1.xpose.msra.mxu0 0.0
    %1152 = vmatprep.subr.mxu0 0.0
    %1153 = vmatpush1.xpose.msra.mxu0 0.0
    %1154 = vmatprep.subr.mxu0 0.0
    %1155 = vmatpush1.xpose.msra.mxu0 0.0
    %1156 = vmatprep.subr.mxu0 0.0
    %1157 = vmatpush1.xpose.msra.mxu0 0.0
    %1158 = vmatprep.subr.mxu0 0.0
    %1159 = vmatpush1.xpose.msra.mxu0 0.0
    %1160 = vmatprep.subr.mxu0 0.0
    %1161 = vmatpush1.xpose.msra.mxu0 0.0
    %1162 = vmatprep.subr.mxu0 0.0
    %1163 = vmatpush1.xpose.msra.mxu0 %v1144
    %1164 = vmatprep.subr.mxu0 0.0
    %1165 = vmatpush1.xpose.msra.mxu0 %v1142
    %1166 = vmatprep.subr.mxu0 0.0
    %1167 = vmatpush1.xpose.msra.mxu0 %v1140
    %1168 = vmatprep.subr.mxu0 0.0
    %1169 = vmatpush1.xpose.msra.mxu0 %v1138
    %1170 = vmatprep.subr.mxu0 0.0
    %1171 = vmatpush1.xpose.msra.mxu0 %v1136
    %1172 = vmatprep.subr.mxu0 0.0
    %1173 = vmatpush1.xpose.msra.mxu0 %v1134
    %1174 = vmatprep.subr.mxu0 0.0
    %1175 = vmatpush1.xpose.msra.mxu0 %v1132
    %1176 = vmatprep.subr.mxu0 0.0
    %1177 = vmatpush1.xpose.msra.mxu0 %v1130
    %1178 = vmatprep.subr.mxu0 0.0
    %1179 = vmatpush2.xpose.msra.mxu0 0.0
    %1180 = vmatprep.subr.mxu0 0.0
    %1181 = vmatpush2.xpose.msra.mxu0 0.0
    %1182 = vmatprep.subr.mxu0 0.0
    %1183 = vmatpush2.xpose.msra.mxu0 0.0
    %1184 = vmatprep.subr.mxu0 0.0
    %1185 = vmatpush2.xpose.msra.mxu0 0.0
    %1186 = vmatprep.subr.mxu0 0.0
    %1187 = vmatpush2.xpose.msra.mxu0 0.0
    %1188 = vmatprep.subr.mxu0 0.0
    %1189 = vmatpush2.xpose.msra.mxu0 0.0
    %1190 = vmatprep.subr.mxu0 0.0
    %1191 = vmatpush2.xpose.msra.mxu0 0.0
    %1192 = vmatprep.subr.mxu0 0.0
    %1193 = vmatpush2.xpose.msra.mxu0 0.0
    %1194 = vmatprep.subr.mxu0 0.0
    %1195 = vmatpush2.xpose.msra.mxu0 0.0
    %1196 = vmatprep.subr.mxu0 0.0
    %1197 = vmatpush2.xpose.msra.mxu0 0.0
    %1198 = vmatprep.subr.mxu0 0.0
    %1199 = vmatpush2.xpose.msra.mxu0 0.0
    %1200 = vmatprep.subr.mxu0 0.0
    %1201 = vmatpush2.xpose.msra.mxu0 0.0
    %1202 = vmatprep.subr.mxu0 0.0
    %1203 = vmatpush2.xpose.msra.mxu0 0.0
    %1204 = vmatprep.subr.mxu0 0.0
    %1205 = vmatpush2.xpose.msra.mxu0 0.0
    %1206 = vmatprep.subr.mxu0 0.0
    %1207 = vmatpush2.xpose.msra.mxu0 0.0
    %1208 = vmatprep.subr.mxu0 0.0
    %1209 = vmatpush2.xpose.msra.mxu0 0.0
    %1210 = vmatprep.mubr.f32.mxu0 0.0
    %1211 = vmatmul.mubr.f32.gmra.mxu0 %v1125
    %v1212 = vpop.f32.mrf.mxu0
    %v1213 = vadd.f32 %v119, %v1212
    %v1214 = vpop.f32.mrf.mxu0
    %1215 = vmatprep.mubr.f32.mxu0 0.0
    %1216 = vmatmul.mubr.f32.gmra.mxu0 %v1128
    %v1217 = vpop.f32.mrf.mxu0
    %v1218 = vadd.f32 %v120, %v1217
    %v1219 = vpop.f32.mrf.mxu0
    %1220 = vdwg.mxu0
    %v1221 = vsel %vm37, %v1213, -inf
    %1222 = vmax.xlane.f32.xlu0 %v1221
    %v1223 = vpop.xlane.xlu0 %1222
    %v1224 = vsel %vm37, %v1218, -inf
    %1225 = vmax.xlane.f32.xlu0 %v1224
    %v1226 = vpop.xlane.xlu0 %1225
    %v1227 = vsub.f32 %v1213, %v1223
    %v1228 = vsub.f32 %v1218, %v1226
    %v1229 = vmul.f32 %v1227, 1.442695
    %v1230 = vpow.pop %v1229
    %v1231 = vmul.f32 %v1228, 1.442695
    %v1232 = vpow.pop %v1231
    %v1234 = vsel %vm37, %v1230, 0
    %v1237 = vsel %vm37, %v1232, 0
    %1239 = vmatprep.subr.mxu0 0.0
    %1240 = vmatpush1.msra.mxu0 0.0
    %1241 = vmatprep.subr.mxu0 0.0
    %1242 = vmatpush1.msra.mxu0 0.0
    %1243 = vmatprep.subr.mxu0 0.0
    %1244 = vmatpush1.msra.mxu0 0.0
    %1245 = vmatprep.subr.mxu0 0.0
    %1246 = vmatpush1.msra.mxu0 0.0
    %1247 = vmatprep.subr.mxu0 0.0
    %1248 = vmatpush1.msra.mxu0 0.0
    %1249 = vmatprep.subr.mxu0 0.0
    %1250 = vmatpush1.msra.mxu0 0.0
    %1251 = vmatprep.subr.mxu0 0.0
    %1252 = vmatpush1.msra.mxu0 0.0
    %1253 = vmatprep.subr.mxu0 0.0
    %1254 = vmatpush1.msra.mxu0 0.0
    %1255 = vmatprep.subr.mxu0 0.0
    %1256 = vmatpush1.msra.mxu0 %v136
    %1257 = vmatprep.subr.mxu0 0.0
    %1258 = vmatpush1.msra.mxu0 %v135
    %1259 = vmatprep.subr.mxu0 0.0
    %1260 = vmatpush1.msra.mxu0 %v134
    %1261 = vmatprep.subr.mxu0 0.0
    %1262 = vmatpush1.msra.mxu0 %v133
    %1263 = vmatprep.subr.mxu0 0.0
    %1264 = vmatpush1.msra.mxu0 %v132
    %1265 = vmatprep.subr.mxu0 0.0
    %1266 = vmatpush1.msra.mxu0 %v131
    %1267 = vmatprep.subr.mxu0 0.0
    %1268 = vmatpush1.msra.mxu0 %v130
    %1269 = vmatprep.subr.mxu0 0.0
    %1270 = vmatpush1.msra.mxu0 %v129
    %1271 = vmatprep.subr.mxu0 0.0
    %1272 = vmatpush2.msra.mxu0 0.0
    %1273 = vmatprep.subr.mxu0 0.0
    %1274 = vmatpush2.msra.mxu0 0.0
    %1275 = vmatprep.subr.mxu0 0.0
    %1276 = vmatpush2.msra.mxu0 0.0
    %1277 = vmatprep.subr.mxu0 0.0
    %1278 = vmatpush2.msra.mxu0 0.0
    %1279 = vmatprep.subr.mxu0 0.0
    %1280 = vmatpush2.msra.mxu0 0.0
    %1281 = vmatprep.subr.mxu0 0.0
    %1282 = vmatpush2.msra.mxu0 0.0
    %1283 = vmatprep.subr.mxu0 0.0
    %1284 = vmatpush2.msra.mxu0 0.0
    %1285 = vmatprep.subr.mxu0 0.0
    %1286 = vmatpush2.msra.mxu0 0.0
    %1287 = vmatprep.subr.mxu0 0.0
    %1288 = vmatpush2.msra.mxu0 0.0
    %1289 = vmatprep.subr.mxu0 0.0
    %1290 = vmatpush2.msra.mxu0 0.0
    %1291 = vmatprep.subr.mxu0 0.0
    %1292 = vmatpush2.msra.mxu0 0.0
    %1293 = vmatprep.subr.mxu0 0.0
    %1294 = vmatpush2.msra.mxu0 0.0
    %1295 = vmatprep.subr.mxu0 0.0
    %1296 = vmatpush2.msra.mxu0 0.0
    %1297 = vmatprep.subr.mxu0 0.0
    %1298 = vmatpush2.msra.mxu0 0.0
    %1299 = vmatprep.subr.mxu0 0.0
    %1300 = vmatpush2.msra.mxu0 0.0
    %1301 = vmatprep.subr.mxu0 0.0
    %1302 = vmatpush2.msra.mxu0 0.0
    %1303 = vmatprep.mubr.f32.mxu0 0.0
    %1304 = vmatmul.mubr.f32.gmra.mxu0 %v1234
    %v1305 = vpop.f32.mrf.mxu0
    %v1306 = vadd.f32 0.0, %v1305
    %v1307 = vpop.f32.mrf.mxu0
    %1308 = vmatprep.mubr.f32.mxu0 0.0
    %1309 = vmatmul.mubr.f32.gmra.mxu0 %v1237
    %v1310 = vpop.f32.mrf.mxu0
    %v1311 = vadd.f32 0.0, %v1310
    %v1312 = vpop.f32.mrf.mxu0
    %1313 = vdwg.mxu0
    %v1314 = vmax.f32 %v1306, 1e-30
    %v1315 = vmax.f32 %v1311, 1e-30
    %v1316 = vrcp.pop %v1314
    %v1317 = vmul.f32 %v1230, %v1316
    %v1318 = vrcp.pop %v1315
    %v1319 = vmul.f32 %v1232, %v1318
    %1328 = vrot.lane.b32.xlu0 %v1092, 64
    %v1329 = vpop.permute.xlu0 %1328
    %1330 = vrot.lane.b32.xlu0 %v1093, 64
    %v1331 = vpop.permute.xlu0 %1330
    %1332 = vrot.lane.b32.xlu0 %v1094, 64
    %v1333 = vpop.permute.xlu0 %1332
    %1334 = vrot.lane.b32.xlu0 %v1095, 64
    %v1335 = vpop.permute.xlu0 %1334
    %1336 = vrot.lane.b32.xlu0 %v1096, 64
    %v1337 = vpop.permute.xlu0 %1336
    %1338 = vrot.lane.b32.xlu0 %v1097, 64
    %v1339 = vpop.permute.xlu0 %1338
    %1340 = vrot.lane.b32.xlu0 %v1098, 64
    %v1341 = vpop.permute.xlu0 %1340
    %1342 = vrot.lane.b32.xlu0 %v1099, 64
    %v1343 = vpop.permute.xlu0 %1342
    %v1353 = vsel %vm37, %v1317, 0
    %v1356 = vsel %vm37, %v1319, 0
    %1358 = vmatprep.subr.mxu0 0.0
    %1359 = vmatpush1.msra.mxu0 0.0
    %1360 = vmatprep.subr.mxu0 0.0
    %1361 = vmatpush1.msra.mxu0 0.0
    %1362 = vmatprep.subr.mxu0 0.0
    %1363 = vmatpush1.msra.mxu0 0.0
    %1364 = vmatprep.subr.mxu0 0.0
    %1365 = vmatpush1.msra.mxu0 0.0
    %1366 = vmatprep.subr.mxu0 0.0
    %1367 = vmatpush1.msra.mxu0 0.0
    %1368 = vmatprep.subr.mxu0 0.0
    %1369 = vmatpush1.msra.mxu0 0.0
    %1370 = vmatprep.subr.mxu0 0.0
    %1371 = vmatpush1.msra.mxu0 0.0
    %1372 = vmatprep.subr.mxu0 0.0
    %1373 = vmatpush1.msra.mxu0 0.0
    %1374 = vmatprep.subr.mxu0 0.0
    %1375 = vmatpush1.msra.mxu0 %v1343
    %1376 = vmatprep.subr.mxu0 0.0
    %1377 = vmatpush1.msra.mxu0 %v1341
    %1378 = vmatprep.subr.mxu0 0.0
    %1379 = vmatpush1.msra.mxu0 %v1339
    %1380 = vmatprep.subr.mxu0 0.0
    %1381 = vmatpush1.msra.mxu0 %v1337
    %1382 = vmatprep.subr.mxu0 0.0
    %1383 = vmatpush1.msra.mxu0 %v1335
    %1384 = vmatprep.subr.mxu0 0.0
    %1385 = vmatpush1.msra.mxu0 %v1333
    %1386 = vmatprep.subr.mxu0 0.0
    %1387 = vmatpush1.msra.mxu0 %v1331
    %1388 = vmatprep.subr.mxu0 0.0
    %1389 = vmatpush1.msra.mxu0 %v1329
    %1390 = vmatprep.subr.mxu0 0.0
    %1391 = vmatpush2.msra.mxu0 0.0
    %1392 = vmatprep.subr.mxu0 0.0
    %1393 = vmatpush2.msra.mxu0 0.0
    %1394 = vmatprep.subr.mxu0 0.0
    %1395 = vmatpush2.msra.mxu0 0.0
    %1396 = vmatprep.subr.mxu0 0.0
    %1397 = vmatpush2.msra.mxu0 0.0
    %1398 = vmatprep.subr.mxu0 0.0
    %1399 = vmatpush2.msra.mxu0 0.0
    %1400 = vmatprep.subr.mxu0 0.0
    %1401 = vmatpush2.msra.mxu0 0.0
    %1402 = vmatprep.subr.mxu0 0.0
    %1403 = vmatpush2.msra.mxu0 0.0
    %1404 = vmatprep.subr.mxu0 0.0
    %1405 = vmatpush2.msra.mxu0 0.0
    %1406 = vmatprep.subr.mxu0 0.0
    %1407 = vmatpush2.msra.mxu0 0.0
    %1408 = vmatprep.subr.mxu0 0.0
    %1409 = vmatpush2.msra.mxu0 0.0
    %1410 = vmatprep.subr.mxu0 0.0
    %1411 = vmatpush2.msra.mxu0 0.0
    %1412 = vmatprep.subr.mxu0 0.0
    %1413 = vmatpush2.msra.mxu0 0.0
    %1414 = vmatprep.subr.mxu0 0.0
    %1415 = vmatpush2.msra.mxu0 0.0
    %1416 = vmatprep.subr.mxu0 0.0
    %1417 = vmatpush2.msra.mxu0 0.0
    %1418 = vmatprep.subr.mxu0 0.0
    %1419 = vmatpush2.msra.mxu0 0.0
    %1420 = vmatprep.subr.mxu0 0.0
    %1421 = vmatpush2.msra.mxu0 0.0
    %1422 = vmatprep.mubr.f32.mxu0 0.0
    %1423 = vmatmul.mubr.f32.gmra.mxu0 %v1353
    %v1424 = vpop.f32.mrf.mxu0
    %v1425 = vadd.f32 0.0, %v1424
    %v1426 = vpop.f32.mrf.mxu0
    %1427 = vmatprep.mubr.f32.mxu0 0.0
    %1428 = vmatmul.mubr.f32.gmra.mxu0 %v1356
    %v1429 = vpop.f32.mrf.mxu0
    %v1430 = vadd.f32 0.0, %v1429
    %v1431 = vpop.f32.mrf.mxu0
    %1432 = vdwg.mxu0
    %v1433 = vld [vmem:[#allocation2 + $0x210] sm:$0xff]
    %v1434 = vld [vmem:[#allocation2 + $0x218] sm:$0xff]
    %v1435 = vld [vmem:[#allocation2 + $0x220] sm:$0xff]
    %v1436 = vld [vmem:[#allocation2 + $0x228] sm:$0xff]
    %v1437 = vld [vmem:[#allocation2 + $0x230] sm:$0x1]
    %v1438 = vlaneseq
    %v1439 = vshrl.u32 %v1438, 7
    %v1440 = vsub.s32 0, %v1439
    %v1441 = vrot.slane %v1437, %v1440
    %v1443 = vsel %vm146, %v1425, 0
    %v1446 = vsel %vm146, %v1430, 0
    %1448 = vmatprep.subr.mxu0 0.0
    %1449 = vmatpush1.msra.mxu0 0.0
    %1450 = vmatprep.subr.mxu0 0.0
    %1451 = vmatpush1.msra.mxu0 0.0
    %1452 = vmatprep.subr.mxu0 0.0
    %1453 = vmatpush1.msra.mxu0 0.0
    %1454 = vmatprep.subr.mxu0 0.0
    %1455 = vmatpush1.msra.mxu0 0.0
    %1456 = vmatprep.subr.mxu0 0.0
    %1457 = vmatpush1.msra.mxu0 0.0
    %1458 = vmatprep.subr.mxu0 0.0
    %1459 = vmatpush1.msra.mxu0 0.0
    %1460 = vmatprep.subr.mxu0 0.0
    %1461 = vmatpush1.msra.mxu0 0.0
    %1462 = vmatprep.subr.mxu0 0.0
    %1463 = vmatpush1.msra.mxu0 0.0
    %1464 = vmatprep.subr.mxu0 0.0
    %1465 = vmatpush1.msra.mxu0 0.0
    %1466 = vmatprep.subr.mxu0 0.0
    %1467 = vmatpush1.msra.mxu0 0.0
    %1468 = vmatprep.subr.mxu0 0.0
    %1469 = vmatpush1.msra.mxu0 0.0
    %1470 = vmatprep.subr.mxu0 0.0
    %1471 = vmatpush1.msra.mxu0 0.0
    %1472 = vmatprep.subr.mxu0 0.0
    %1473 = vmatpush1.msra.mxu0 %v1436
    %1474 = vmatprep.subr.mxu0 0.0
    %1475 = vmatpush1.msra.mxu0 %v1435
    %1476 = vmatprep.subr.mxu0 0.0
    %1477 = vmatpush1.msra.mxu0 %v1434
    %1478 = vmatprep.subr.mxu0 0.0
    %1479 = vmatpush1.msra.mxu0 %v1433
    %1480 = vmatprep.subr.mxu0 0.0
    %1481 = vmatpush2.msra.mxu0 0.0
    %1482 = vmatprep.subr.mxu0 0.0
    %1483 = vmatpush2.msra.mxu0 0.0
    %1484 = vmatprep.subr.mxu0 0.0
    %1485 = vmatpush2.msra.mxu0 0.0
    %1486 = vmatprep.subr.mxu0 0.0
    %1487 = vmatpush2.msra.mxu0 0.0
    %1488 = vmatprep.subr.mxu0 0.0
    %1489 = vmatpush2.msra.mxu0 0.0
    %1490 = vmatprep.subr.mxu0 0.0
    %1491 = vmatpush2.msra.mxu0 0.0
    %1492 = vmatprep.subr.mxu0 0.0
    %1493 = vmatpush2.msra.mxu0 0.0
    %1494 = vmatprep.subr.mxu0 0.0
    %1495 = vmatpush2.msra.mxu0 0.0
    %1496 = vmatprep.subr.mxu0 0.0
    %1497 = vmatpush2.msra.mxu0 0.0
    %1498 = vmatprep.subr.mxu0 0.0
    %1499 = vmatpush2.msra.mxu0 0.0
    %1500 = vmatprep.subr.mxu0 0.0
    %1501 = vmatpush2.msra.mxu0 0.0
    %1502 = vmatprep.subr.mxu0 0.0
    %1503 = vmatpush2.msra.mxu0 0.0
    %1504 = vmatprep.subr.mxu0 0.0
    %1505 = vmatpush2.msra.mxu0 0.0
    %1506 = vmatprep.subr.mxu0 0.0
    %1507 = vmatpush2.msra.mxu0 0.0
    %1508 = vmatprep.subr.mxu0 0.0
    %1509 = vmatpush2.msra.mxu0 0.0
    %1510 = vmatprep.subr.mxu0 0.0
    %1511 = vmatpush2.msra.mxu0 0.0
    %1512 = vmatprep.mubr.f32.mxu0 0.0
    %1513 = vmatmul.mubr.f32.gmra.mxu0 %v1443
    %v1514 = vpop.f32.mrf.mxu0
    %v1515 = vadd.f32 %v1441, %v1514
    %v1516 = vpop.f32.mrf.mxu0
    %1517 = vmatprep.mubr.f32.mxu0 0.0
    %1518 = vmatmul.mubr.f32.gmra.mxu0 %v1446
    %v1519 = vpop.f32.mrf.mxu0
    %v1520 = vadd.f32 %v1441, %v1519
    %v1521 = vpop.f32.mrf.mxu0
    %1522 = vdwg.mxu0
    %v1523 = vadd.f32 %v992, %v1515
    %v1524 = vadd.f32 %v993, %v1520
    %v1525 = vld [vmem:[#allocation2 + $0x2a8] sm:$0x1]
    %v1526 = vld [vmem:[#allocation2 + $0x2b0] sm:$0x1]
    %v1527 = vsel %vm146, %v1523, 0.0
    %1528 = vadd.xlane.f32.xlu0 %v1527
    %v1529 = vpop.xlane.xlu0 %1528
    %v1530 = vsel %vm146, %v1524, 0.0
    %1531 = vadd.xlane.f32.xlu0 %v1530
    %v1532 = vpop.xlane.xlu0 %1531
    %v1533 = vmul.f32 %v1529, %v733
    %v1534 = vmul.f32 %v1532, %v733
    %v1535 = vsub.f32 %v1523, %v1533
    %v1536 = vsub.f32 %v1524, %v1534
    %v1537 = vmul.f32 %v1535, %v1535
    %v1538 = vmul.f32 %v1536, %v1536
    %v1539 = vsel %vm146, %v1537, 0.0
    %1540 = vadd.xlane.f32.xlu0 %v1539
    %v1541 = vpop.xlane.xlu0 %1540
    %v1542 = vsel %vm146, %v1538, 0.0
    %1543 = vadd.xlane.f32.xlu0 %v1542
    %v1544 = vpop.xlane.xlu0 %1543
    %v1545 = vmul.f32 %v1541, %v733
    %v1546 = vmul.f32 %v1544, %v733
    %v1547 = vadd.f32 %v1545, 1e-05
    %v1548 = vadd.f32 %v1546, 1e-05
    %v1549 = vrsqrt.pop %v1547
    %v1550 = vrsqrt.pop %v1548
    %v1551 = vmul.f32 %v1535, %v1549
    %v1552 = vmul.f32 %v1536, %v1550
    %v1553 = vlaneseq
    %v1554 = vshrl.u32 %v1553, 7
    %v1555 = vsub.s32 0, %v1554
    %v1556 = vrot.slane %v1525, %v1555
    %v1557 = vmul.f32 %v1551, %v1556
    %v1558 = vmul.f32 %v1552, %v1556
    %v1559 = vlaneseq
    %v1560 = vshrl.u32 %v1559, 7
    %v1561 = vsub.s32 0, %v1560
    %v1562 = vrot.slane %v1526, %v1561
    %v1563 = vadd.f32 %v1557, %v1562
    %v1564 = vadd.f32 %v1558, %v1562
    %v1565 = vld [vmem:[#allocation2 + $0x238] sm:$0xff]
    %v1566 = vld [vmem:[#allocation2 + $0x240] sm:$0xff]
    %v1567 = vld [vmem:[#allocation2 + $0x248] sm:$0xff]
    %v1568 = vld [vmem:[#allocation2 + $0x250] sm:$0xff]
    %v1569 = vld [vmem:[#allocation2 + $0x258] sm:$0x1]
    %v1570 = vlaneseq
    %v1571 = vshrl.u32 %v1570, 7
    %v1572 = vsub.s32 0, %v1571
    %v1573 = vrot.slane %v1569, %v1572
    %v1575 = vsel %vm146, %v1563, 0
    %v1578 = vsel %vm146, %v1564, 0
    %1580 = vmatprep.subr.mxu0 0.0
    %1581 = vmatpush1.msra.mxu0 0.0
    %1582 = vmatprep.subr.mxu0 0.0
    %1583 = vmatpush1.msra.mxu0 0.0
    %1584 = vmatprep.subr.mxu0 0.0
    %1585 = vmatpush1.msra.mxu0 0.0
    %1586 = vmatprep.subr.mxu0 0.0
    %1587 = vmatpush1.msra.mxu0 0.0
    %1588 = vmatprep.subr.mxu0 0.0
    %1589 = vmatpush1.msra.mxu0 0.0
    %1590 = vmatprep.subr.mxu0 0.0
    %1591 = vmatpush1.msra.mxu0 0.0
    %1592 = vmatprep.subr.mxu0 0.0
    %1593 = vmatpush1.msra.mxu0 0.0
    %1594 = vmatprep.subr.mxu0 0.0
    %1595 = vmatpush1.msra.mxu0 0.0
    %1596 = vmatprep.subr.mxu0 0.0
    %1597 = vmatpush1.msra.mxu0 0.0
    %1598 = vmatprep.subr.mxu0 0.0
    %1599 = vmatpush1.msra.mxu0 0.0
    %1600 = vmatprep.subr.mxu0 0.0
    %1601 = vmatpush1.msra.mxu0 0.0
    %1602 = vmatprep.subr.mxu0 0.0
    %1603 = vmatpush1.msra.mxu0 0.0
    %1604 = vmatprep.subr.mxu0 0.0
    %1605 = vmatpush1.msra.mxu0 %v1568
    %1606 = vmatprep.subr.mxu0 0.0
    %1607 = vmatpush1.msra.mxu0 %v1567
    %1608 = vmatprep.subr.mxu0 0.0
    %1609 = vmatpush1.msra.mxu0 %v1566
    %1610 = vmatprep.subr.mxu0 0.0
    %1611 = vmatpush1.msra.mxu0 %v1565
    %1612 = vmatprep.subr.mxu0 0.0
    %1613 = vmatpush2.msra.mxu0 0.0
    %1614 = vmatprep.subr.mxu0 0.0
    %1615 = vmatpush2.msra.mxu0 0.0
    %1616 = vmatprep.subr.mxu0 0.0
    %1617 = vmatpush2.msra.mxu0 0.0
    %1618 = vmatprep.subr.mxu0 0.0
    %1619 = vmatpush2.msra.mxu0 0.0
    %1620 = vmatprep.subr.mxu0 0.0
    %1621 = vmatpush2.msra.mxu0 0.0
    %1622 = vmatprep.subr.mxu0 0.0
    %1623 = vmatpush2.msra.mxu0 0.0
    %1624 = vmatprep.subr.mxu0 0.0
    %1625 = vmatpush2.msra.mxu0 0.0
    %1626 = vmatprep.subr.mxu0 0.0
    %1627 = vmatpush2.msra.mxu0 0.0
    %1628 = vmatprep.subr.mxu0 0.0
    %1629 = vmatpush2.msra.mxu0 0.0
    %1630 = vmatprep.subr.mxu0 0.0
    %1631 = vmatpush2.msra.mxu0 0.0
    %1632 = vmatprep.subr.mxu0 0.0
    %1633 = vmatpush2.msra.mxu0 0.0
    %1634 = vmatprep.subr.mxu0 0.0
    %1635 = vmatpush2.msra.mxu0 0.0
    %1636 = vmatprep.subr.mxu0 0.0
    %1637 = vmatpush2.msra.mxu0 0.0
    %1638 = vmatprep.subr.mxu0 0.0
    %1639 = vmatpush2.msra.mxu0 0.0
    %1640 = vmatprep.subr.mxu0 0.0
    %1641 = vmatpush2.msra.mxu0 0.0
    %1642 = vmatprep.subr.mxu0 0.0
    %1643 = vmatpush2.msra.mxu0 0.0
    %1644 = vmatprep.mubr.f32.mxu0 0.0
    %1645 = vmatmul.mubr.f32.gmra.mxu0 %v1575
    %v1646 = vpop.f32.mrf.mxu0
    %v1647 = vadd.f32 %v1573, %v1646
    %v1648 = vpop.f32.mrf.mxu0
    %1649 = vmatprep.mubr.f32.mxu0 0.0
    %1650 = vmatmul.mubr.f32.gmra.mxu0 %v1578
    %v1651 = vpop.f32.mrf.mxu0
    %v1652 = vadd.f32 %v1573, %v1651
    %v1653 = vpop.f32.mrf.mxu0
    %1654 = vdwg.mxu0
    %v1655 = vmax.f32 %v1647, 0.0
    %v1656 = vmax.f32 %v1652, 0.0
    %v1657 = vld [vmem:[#allocation2 + $0x260] sm:$0xff]
    %v1658 = vld [vmem:[#allocation2 + $0x268] sm:$0xff]
    %v1659 = vld [vmem:[#allocation2 + $0x270] sm:$0xff]
    %v1660 = vld [vmem:[#allocation2 + $0x278] sm:$0xff]
    %v1661 = vld [vmem:[#allocation2 + $0x280] sm:$0xff]
    %v1662 = vld [vmem:[#allocation2 + $0x288] sm:$0xff]
    %v1663 = vld [vmem:[#allocation2 + $0x290] sm:$0xff]
    %v1664 = vld [vmem:[#allocation2 + $0x298] sm:$0xff]
    %v1665 = vld [vmem:[#allocation2 + $0x2a0] sm:$0x1]
    %v1666 = vlaneseq
    %v1667 = vshrl.u32 %v1666, 7
    %v1668 = vsub.s32 0, %v1667
    %v1669 = vrot.slane %v1665, %v1668
    %v1671 = vsel %vm37, %v1655, 0
    %v1674 = vsel %vm37, %v1656, 0
    %1676 = vmatprep.subr.mxu0 0.0
    %1677 = vmatpush1.msra.mxu0 0.0
    %1678 = vmatprep.subr.mxu0 0.0
    %1679 = vmatpush1.msra.mxu0 0.0
    %1680 = vmatprep.subr.mxu0 0.0
    %1681 = vmatpush1.msra.mxu0 0.0
    %1682 = vmatprep.subr.mxu0 0.0
    %1683 = vmatpush1.msra.mxu0 0.0
    %1684 = vmatprep.subr.mxu0 0.0
    %1685 = vmatpush1.msra.mxu0 0.0
    %1686 = vmatprep.subr.mxu0 0.0
    %1687 = vmatpush1.msra.mxu0 0.0
    %1688 = vmatprep.subr.mxu0 0.0
    %1689 = vmatpush1.msra.mxu0 0.0
    %1690 = vmatprep.subr.mxu0 0.0
    %1691 = vmatpush1.msra.mxu0 0.0
    %1692 = vmatprep.subr.mxu0 0.0
    %1693 = vmatpush1.msra.mxu0 %v1664
    %1694 = vmatprep.subr.mxu0 0.0
    %1695 = vmatpush1.msra.mxu0 %v1663
    %1696 = vmatprep.subr.mxu0 0.0
    %1697 = vmatpush1.msra.mxu0 %v1662
    %1698 = vmatprep.subr.mxu0 0.0
    %1699 = vmatpush1.msra.mxu0 %v1661
    %1700 = vmatprep.subr.mxu0 0.0
    %1701 = vmatpush1.msra.mxu0 %v1660
    %1702 = vmatprep.subr.mxu0 0.0
    %1703 = vmatpush1.msra.mxu0 %v1659
    %1704 = vmatprep.subr.mxu0 0.0
    %1705 = vmatpush1.msra.mxu0 %v1658
    %1706 = vmatprep.subr.mxu0 0.0
    %1707 = vmatpush1.msra.mxu0 %v1657
    %1708 = vmatprep.subr.mxu0 0.0
    %1709 = vmatpush2.msra.mxu0 0.0
    %1710 = vmatprep.subr.mxu0 0.0
    %1711 = vmatpush2.msra.mxu0 0.0
    %1712 = vmatprep.subr.mxu0 0.0
    %1713 = vmatpush2.msra.mxu0 0.0
    %1714 = vmatprep.subr.mxu0 0.0
    %1715 = vmatpush2.msra.mxu0 0.0
    %1716 = vmatprep.subr.mxu0 0.0
    %1717 = vmatpush2.msra.mxu0 0.0
    %1718 = vmatprep.subr.mxu0 0.0
    %1719 = vmatpush2.msra.mxu0 0.0
    %1720 = vmatprep.subr.mxu0 0.0
    %1721 = vmatpush2.msra.mxu0 0.0
    %1722 = vmatprep.subr.mxu0 0.0
    %1723 = vmatpush2.msra.mxu0 0.0
    %1724 = vmatprep.subr.mxu0 0.0
    %1725 = vmatpush2.msra.mxu0 0.0
    %1726 = vmatprep.subr.mxu0 0.0
    %1727 = vmatpush2.msra.mxu0 0.0
    %1728 = vmatprep.subr.mxu0 0.0
    %1729 = vmatpush2.msra.mxu0 0.0
    %1730 = vmatprep.subr.mxu0 0.0
    %1731 = vmatpush2.msra.mxu0 0.0
    %1732 = vmatprep.subr.mxu0 0.0
    %1733 = vmatpush2.msra.mxu0 0.0
    %1734 = vmatprep.subr.mxu0 0.0
    %1735 = vmatpush2.msra.mxu0 0.0
    %1736 = vmatprep.subr.mxu0 0.0
    %1737 = vmatpush2.msra.mxu0 0.0
    %1738 = vmatprep.subr.mxu0 0.0
    %1739 = vmatpush2.msra.mxu0 0.0
    %1740 = vmatprep.mubr.f32.mxu0 0.0
    %1741 = vmatmul.mubr.f32.gmra.mxu0 %v1671
    %v1742 = vpop.f32.mrf.mxu0
    %v1743 = vadd.f32 %v1669, %v1742
    %v1744 = vpop.f32.mrf.mxu0
    %1745 = vmatprep.mubr.f32.mxu0 0.0
    %1746 = vmatmul.mubr.f32.gmra.mxu0 %v1674
    %v1747 = vpop.f32.mrf.mxu0
    %v1748 = vadd.f32 %v1669, %v1747
    %v1749 = vpop.f32.mrf.mxu0
    %1750 = vdwg.mxu0
    %v1751 = vadd.f32 %v1563, %v1743
    %v1752 = vadd.f32 %v1564, %v1748
    %v1753 = vld [vmem:[#allocation2 + $0x2b8] sm:$0x1]
    %v1754 = vld [vmem:[#allocation2 + $0x2c0] sm:$0x1]
    %v1755 = vsel %vm146, %v1751, 0.0
    %1756 = vadd.xlane.f32.xlu0 %v1755
    %v1757 = vpop.xlane.xlu0 %1756
    %v1758 = vsel %vm146, %v1752, 0.0
    %1759 = vadd.xlane.f32.xlu0 %v1758
    %v1760 = vpop.xlane.xlu0 %1759
    %v1761 = vmul.f32 %v1757, %v733
    %v1762 = vmul.f32 %v1760, %v733
    %v1763 = vsub.f32 %v1751, %v1761
    %v1764 = vsub.f32 %v1752, %v1762
    %v1765 = vmul.f32 %v1763, %v1763
    %v1766 = vmul.f32 %v1764, %v1764
    %v1767 = vsel %vm146, %v1765, 0.0
    %1768 = vadd.xlane.f32.xlu0 %v1767
    %v1769 = vpop.xlane.xlu0 %1768
    %v1770 = vsel %vm146, %v1766, 0.0
    %1771 = vadd.xlane.f32.xlu0 %v1770
    %v1772 = vpop.xlane.xlu0 %1771
    %v1773 = vmul.f32 %v1769, %v733
    %v1774 = vmul.f32 %v1772, %v733
    %v1775 = vadd.f32 %v1773, 1e-05
    %v1776 = vadd.f32 %v1774, 1e-05
    %v1777 = vrsqrt.pop %v1775
    %v1778 = vrsqrt.pop %v1776
    %v1779 = vmul.f32 %v1763, %v1777
    %v1780 = vmul.f32 %v1764, %v1778
    %v1781 = vlaneseq
    %v1782 = vshrl.u32 %v1781, 7
    %v1783 = vsub.s32 0, %v1782
    %v1784 = vrot.slane %v1753, %v1783
    %v1785 = vmul.f32 %v1779, %v1784
    %v1786 = vmul.f32 %v1780, %v1784
    %v1787 = vlaneseq
    %v1788 = vshrl.u32 %v1787, 7
    %v1789 = vsub.s32 0, %v1788
    %v1790 = vrot.slane %v1754, %v1789
    %v1791 = vadd.f32 %v1785, %v1790
    %v1792 = vadd.f32 %v1786, %v1790
    %v1793 = vld [vmem:[#allocation2 + $0x40] sm:$0xff]
    %v1794 = vld [vmem:[#allocation2 + $0x48] sm:$0xff]
    %v1795 = vld [vmem:[#allocation2 + $0x50] sm:$0xff]
    %v1796 = vld [vmem:[#allocation2 + $0x58] sm:$0xff]
    %v1797 = vld [vmem:[#allocation2 + $0x60] sm:$0x1]
    %v1798 = vlaneseq
    %v1799 = vshrl.u32 %v1798, 7
    %v1800 = vsub.s32 0, %v1799
    %v1801 = vrot.slane %v1797, %v1800
    %v1803 = vsel %vm146, %v1791, 0
    %v1806 = vsel %vm146, %v1792, 0
    %1808 = vmatprep.subr.mxu0 0.0
    %1809 = vmatpush1.msra.mxu0 0.0
    %1810 = vmatprep.subr.mxu0 0.0
    %1811 = vmatpush1.msra.mxu0 0.0
    %1812 = vmatprep.subr.mxu0 0.0
    %1813 = vmatpush1.msra.mxu0 0.0
    %1814 = vmatprep.subr.mxu0 0.0
    %1815 = vmatpush1.msra.mxu0 0.0
    %1816 = vmatprep.subr.mxu0 0.0
    %1817 = vmatpush1.msra.mxu0 0.0
    %1818 = vmatprep.subr.mxu0 0.0
    %1819 = vmatpush1.msra.mxu0 0.0
    %1820 = vmatprep.subr.mxu0 0.0
    %1821 = vmatpush1.msra.mxu0 0.0
    %1822 = vmatprep.subr.mxu0 0.0
    %1823 = vmatpush1.msra.mxu0 0.0
    %1824 = vmatprep.subr.mxu0 0.0
    %1825 = vmatpush1.msra.mxu0 0.0
    %1826 = vmatprep.subr.mxu0 0.0
    %1827 = vmatpush1.msra.mxu0 0.0
    %1828 = vmatprep.subr.mxu0 0.0
    %1829 = vmatpush1.msra.mxu0 0.0
    %1830 = vmatprep.subr.mxu0 0.0
    %1831 = vmatpush1.msra.mxu0 0.0
    %1832 = vmatprep.subr.mxu0 0.0
    %1833 = vmatpush1.msra.mxu0 %v1796
    %1834 = vmatprep.subr.mxu0 0.0
    %1835 = vmatpush1.msra.mxu0 %v1795
    %1836 = vmatprep.subr.mxu0 0.0
    %1837 = vmatpush1.msra.mxu0 %v1794
    %1838 = vmatprep.subr.mxu0 0.0
    %1839 = vmatpush1.msra.mxu0 %v1793
    %1840 = vmatprep.subr.mxu0 0.0
    %1841 = vmatpush2.msra.mxu0 0.0
    %1842 = vmatprep.subr.mxu0 0.0
    %1843 = vmatpush2.msra.mxu0 0.0
    %1844 = vmatprep.subr.mxu0 0.0
    %1845 = vmatpush2.msra.mxu0 0.0
    %1846 = vmatprep.subr.mxu0 0.0
    %1847 = vmatpush2.msra.mxu0 0.0
    %1848 = vmatprep.subr.mxu0 0.0
    %1849 = vmatpush2.msra.mxu0 0.0
    %1850 = vmatprep.subr.mxu0 0.0
    %1851 = vmatpush2.msra.mxu0 0.0
    %1852 = vmatprep.subr.mxu0 0.0
    %1853 = vmatpush2.msra.mxu0 0.0
    %1854 = vmatprep.subr.mxu0 0.0
    %1855 = vmatpush2.msra.mxu0 0.0
    %1856 = vmatprep.subr.mxu0 0.0
    %1857 = vmatpush2.msra.mxu0 0.0
    %1858 = vmatprep.subr.mxu0 0.0
    %1859 = vmatpush2.msra.mxu0 0.0
    %1860 = vmatprep.subr.mxu0 0.0
    %1861 = vmatpush2.msra.mxu0 0.0
    %1862 = vmatprep.subr.mxu0 0.0
    %1863 = vmatpush2.msra.mxu0 0.0
    %1864 = vmatprep.subr.mxu0 0.0
    %1865 = vmatpush2.msra.mxu0 0.0
    %1866 = vmatprep.subr.mxu0 0.0
    %1867 = vmatpush2.msra.mxu0 0.0
    %1868 = vmatprep.subr.mxu0 0.0
    %1869 = vmatpush2.msra.mxu0 0.0
    %1870 = vmatprep.subr.mxu0 0.0
    %1871 = vmatpush2.msra.mxu0 0.0
    %1872 = vmatprep.mubr.f32.mxu0 0.0
    %1873 = vmatmul.mubr.f32.gmra.mxu0 %v1803
    %v1874 = vpop.f32.mrf.mxu0
    %v1875 = vadd.f32 %v1801, %v1874
    %v1876 = vpop.f32.mrf.mxu0
    %1877 = vmatprep.mubr.f32.mxu0 0.0
    %1878 = vmatmul.mubr.f32.gmra.mxu0 %v1806
    %v1879 = vpop.f32.mrf.mxu0
    %v1880 = vadd.f32 %v1801, %v1879
    %v1881 = vpop.f32.mrf.mxu0
    %1882 = vdwg.mxu0
    %1883 = vst [vmem:[%s2] sm:$0xff] %v1875
    %1884 = vst [vmem:[%s2 + $0x8] sm:$0xff] %v1880
    // Predicated region
    $region14: #{forward.1} parent=1 // pred_check
      _
    $region15: #{forward.1} parent=1 // pred_check_branch
      %1886 = sbr.rel (0) target = $region17
    $region16: #{forward.1} parent=1 // pred_region
      _
    $region17: #{forward.1} parent=1 // pred_fallthru
      _
    // Predicated region
    $region18: #{forward.1} parent=1 // pred_check
      _
    $region19: #{forward.1} parent=1 // pred_check_branch
      %1888 = sbr.rel (0) target = $region21
    $region20: #{forward.1} parent=1 // pred_region
      _
    $region21: #{forward.1} parent=1 // pred_fallthru
      _
    %1889 = vsyncpa [#allocation3], 1

</llo_original>
